<compile_context>
chip_gen: v7x
topology: tpu7x:2x2x1
jax: 0.10.0
libtpu: 0.0.40
codegen_flags: <defaults>
</compile_context>

<pallas_src>
import numpy as np
import jax
import jax.numpy as jnp
from jax import lax
from jax.experimental import pallas as pl
from jax.experimental.pallas import tpu as pltpu


def _upsample_conv_kernel(x0_ref, x1_ref, x2_ref, w_ref, b_ref, o_ref, patch_ref):
    # x{g}_ref : (1, 1, H+2, W+2, Cin)  padded base-resolution slice at depth d+g
    # w_ref    : (27*Cin, 8*Cout)       sub-pixel-collapsed conv weights
    # b_ref    : (1, 8*Cout)            bias tiled over the 8 output parities
    # o_ref    : (1, 1, H*W, 8*Cout)    packed output (parity x channel in lanes)
    # patch_ref: (H, W, 27*Cin)         im2col scratch (built once per step)
    Hp = x0_ref.shape[2]
    Wp = x0_ref.shape[3]
    Cin = x0_ref.shape[4]
    H, W = Hp - 2, Wp - 2

    # Build the im2col slab once per grid step.  Columns ordered
    # (gather_d, gather_h, gather_w, cin) to match the packed weight rows.
    k = 0
    for ref in (x0_ref, x1_ref, x2_ref):                  # gather_d = 0, 1, 2
        for gh in range(3):                               # gather_h
            for gw in range(3):                           # gather_w
                patch_ref[:, :, pl.ds(k * Cin, Cin)] = (
                    ref[0, 0, pl.ds(gh, H), pl.ds(gw, W), :])
                k += 1

    patch = patch_ref[...].reshape(H * W, 27 * Cin)       # leading-dim merge only
    # Single MXU matmul produces all 8 sub-pixel (parity) outputs at once.
    res = jnp.dot(patch, w_ref[...], preferred_element_type=jnp.float32)
    res = res + b_ref[...].astype(jnp.float32)
    o_ref[0, 0] = res.astype(o_ref.dtype)


def _subpixel_weights(w):
    """Collapse a (3,3,3,Cin,Cout) conv weight for nearest-x2-upsample-then-conv.

    Returns (27*Cin, 8*Cout): rows ordered (gd, gh, gw, cin) over the 3x3x3
    neighborhood of the padded BASE-resolution grid, cols ordered
    (pd, ph, pw, cout) over the 8 output sub-pixel parities.
    """
    Cin, Cout = w.shape[3], w.shape[4]
    # S[p, g, k] = 1 iff tap k of an output with parity p reads the base-grid
    # neighbor at gather slot g, where g = (p + k - 1)//2 + 1.
    s = np.zeros((2, 3, 3), np.float32)
    for p in range(2):
        for k in range(3):
            s[p, (p + k - 1) // 2 + 1, k] = 1.0
    S = jnp.asarray(s, dtype=w.dtype)
    w_comb = jnp.einsum('pak,qbl,rcm,klmio->abcipqro', S, S, S, w)
    return w_comb.reshape(27 * Cin, 8 * Cout)


def upsample_forward(x, w, b, with_conv=True):
    """Upsample.forward for fir=False.

    x: (B, C, D, H, W) (NCDHW, PyTorch convention)
    w: (3, 3, 3, Cin, Cout) (DHWIO), b: (Cout,)
    returns: (B, Cout, 2D, 2H, 2W)
    """
    B, C, D, H, W = x.shape
    if not with_conv:
        # nearest-neighbor x2 upsample == F.interpolate(x, (2D,2H,2W), 'nearest')
        return jnp.repeat(jnp.repeat(jnp.repeat(x, 2, axis=2), 2, axis=3), 2, axis=4)

    Cout = w.shape[-1]
    # channels-last + zero-pad by 1, on the SMALL base-resolution tensor only.
    x_cl = jnp.transpose(x, (0, 2, 3, 4, 1))
    x_pad = jnp.pad(x_cl, ((0, 0), (1, 1), (1, 1), (1, 1), (0, 0)))

    w_comb = _subpixel_weights(w)                       # (27*C, 8*Cout)
    b_packed = jnp.tile(b, 8).reshape(1, 8 * Cout)      # bias replicated per parity

    out_packed = pl.pallas_call(
        _upsample_conv_kernel,
        out_shape=jax.ShapeDtypeStruct((B, D, H * W, 8 * Cout), x.dtype),
        grid=(B, D),
        in_specs=[
            # three depth-shifted views of the same padded input = depth halo
            pl.BlockSpec((1, 1, H + 2, W + 2, C), lambda bi, di: (bi, di, 0, 0, 0)),
            pl.BlockSpec((1, 1, H + 2, W + 2, C), lambda bi, di: (bi, di + 1, 0, 0, 0)),
            pl.BlockSpec((1, 1, H + 2, W + 2, C), lambda bi, di: (bi, di + 2, 0, 0, 0)),
            pl.BlockSpec((27 * C, 8 * Cout), lambda bi, di: (0, 0)),
            pl.BlockSpec((1, 8 * Cout), lambda bi, di: (0, 0)),
        ],
        out_specs=pl.BlockSpec((1, 1, H * W, 8 * Cout),
                               lambda bi, di: (bi, di, 0, 0)),
        scratch_shapes=[pltpu.VMEM((H, W, 27 * C), x.dtype)],
        compiler_params=pltpu.CompilerParams(
            dimension_semantics=("parallel", "parallel")),
    )(x_pad, x_pad, x_pad, w_comb, b_packed)

    # de-interleave the 8 parities + back to NCDHW: one layout pass on the output.
    out = out_packed.reshape(B, D, H, W, 2, 2, 2, Cout)
    out = jnp.transpose(out, (0, 7, 1, 4, 2, 5, 3, 6))
    return out.reshape(B, Cout, 2 * D, 2 * H, 2 * W)


if __name__ == "__main__":
    key = jax.random.PRNGKey(0)
    B, Cin, D, H, W = 2, 4, 8, 8, 8
    Cout = Cin  # out_ch defaults to in_ch in the module

    kx, kw, kb = jax.random.split(key, 3)
    x = jax.random.normal(kx, (B, Cin, D, H, W), jnp.float32)
    # deterministic synthetic conv3x3 params (variance-scaling-ish init)
    fan_in = Cin * 3 * 3 * 3
    w = jax.random.normal(kw, (3, 3, 3, Cin, Cout), jnp.float32) / jnp.sqrt(fan_in)
    b = jax.random.normal(kb, (Cout,), jnp.float32) * 0.01

    out = jax.block_until_ready(upsample_forward(x, w, b, with_conv=True))
    assert out.shape == (B, Cout, 2 * D, 2 * H, 2 * W), out.shape

    # pure-JAX reference: nearest upsample + conv_general_dilated
    up = jnp.repeat(jnp.repeat(jnp.repeat(x, 2, axis=2), 2, axis=3), 2, axis=4)
    up_cl = jnp.transpose(up, (0, 2, 3, 4, 1))
    ref = lax.conv_general_dilated(
        up_cl, w, window_strides=(1, 1, 1), padding=[(1, 1)] * 3,
        dimension_numbers=("NDHWC", "DHWIO", "NDHWC")) + b
    ref = jnp.transpose(ref, (0, 4, 1, 2, 3))

    err = float(jnp.max(jnp.abs(out - ref)))
    assert err < 5e-4, f"max abs err {err}"
    print("KERNEL_OK")
</pallas_src>

<mosaic_0001>
module attributes {stable_mosaic.version = 11 : i64} {
  func.func @_upsample_conv_kernel(%arg0: i32, %arg1: i32, %arg2: memref<1x1x10x10x4xf32, #tpu.memory_space<vmem>>, %arg3: memref<1x1x10x10x4xf32, #tpu.memory_space<vmem>>, %arg4: memref<1x1x10x10x4xf32, #tpu.memory_space<vmem>>, %arg5: memref<108x32xf32, #tpu.memory_space<vmem>>, %arg6: memref<1x32xf32, #tpu.memory_space<vmem>>, %arg7: memref<1x1x64x32xf32, #tpu.memory_space<vmem>>, %arg8: memref<8x8x108xf32, #tpu.memory_space<vmem>>) attributes {dimension_semantics = [#tpu.dimension_semantics<parallel>, #tpu.dimension_semantics<parallel>], iteration_bounds = array<i64: 2, 8>, scalar_prefetch = 0 : i64, scratch_operands = 1 : i64, tpu.core_type = #tpu.core_type<tc>, window_params = [{transform_indices = @transform_0, window_bounds = array<i64: 1, 1, 10, 10, 4>}, {transform_indices = @transform_1, window_bounds = array<i64: 1, 1, 10, 10, 4>}, {transform_indices = @transform_2, window_bounds = array<i64: 1, 1, 10, 10, 4>}, {pipeline_mode = #tpu.pipeline_mode<synchronous>, transform_indices = @transform_3, window_bounds = array<i64: 108, 32>}, {pipeline_mode = #tpu.pipeline_mode<synchronous>, transform_indices = @transform_4, window_bounds = array<i64: 1, 32>}, {transform_indices = @transform_5, window_bounds = array<i64: 1, 1, 64, 32>}]} {
    %c0 = arith.constant 0 : index
    %c0_0 = arith.constant 0 : index
    %c0_1 = arith.constant 0 : index
    %c0_2 = arith.constant 0 : index
    %c0_3 = arith.constant 0 : index
    %0 = vector.load %arg2[%c0, %c0_0, %c0_1, %c0_2, %c0_3] : memref<1x1x10x10x4xf32, #tpu.memory_space<vmem>>, vector<1x1x8x8x4xf32>
    %1 = vector.shape_cast %0 : vector<1x1x8x8x4xf32> to vector<8x8x4xf32>
    %c0_4 = arith.constant 0 : index
    %c0_5 = arith.constant 0 : index
    %c0_6 = arith.constant 0 : index
    %2 = vector.load %arg8[%c0_4, %c0_5, %c0_6] : memref<8x8x108xf32, #tpu.memory_space<vmem>>, vector<8x8x4xf32>
    tpu.vector_store %arg8[%c0_4, %c0_5, %c0_6], %1 {strides = array<i32>} : memref<8x8x108xf32, #tpu.memory_space<vmem>>, vector<8x8x4xf32>,
    %c0_7 = arith.constant 0 : index
    %c0_8 = arith.constant 0 : index
    %c0_9 = arith.constant 0 : index
    %c1 = arith.constant 1 : index
    %c0_10 = arith.constant 0 : index
    %3 = vector.load %arg2[%c0_7, %c0_8, %c0_9, %c1, %c0_10] : memref<1x1x10x10x4xf32, #tpu.memory_space<vmem>>, vector<1x1x8x8x4xf32>
    %4 = vector.shape_cast %3 : vector<1x1x8x8x4xf32> to vector<8x8x4xf32>
    %c0_11 = arith.constant 0 : index
    %c0_12 = arith.constant 0 : index
    %c4 = arith.constant 4 : index
    %5 = vector.load %arg8[%c0_11, %c0_12, %c4] : memref<8x8x108xf32, #tpu.memory_space<vmem>>, vector<8x8x4xf32>
    tpu.vector_store %arg8[%c0_11, %c0_12, %c4], %4 {strides = array<i32>} : memref<8x8x108xf32, #tpu.memory_space<vmem>>, vector<8x8x4xf32>,
    %c0_13 = arith.constant 0 : index
    %c0_14 = arith.constant 0 : index
    %c0_15 = arith.constant 0 : index
    %c2 = arith.constant 2 : index
    %c0_16 = arith.constant 0 : index
    %6 = vector.load %arg2[%c0_13, %c0_14, %c0_15, %c2, %c0_16] : memref<1x1x10x10x4xf32, #tpu.memory_space<vmem>>, vector<1x1x8x8x4xf32>
    %7 = vector.shape_cast %6 : vector<1x1x8x8x4xf32> to vector<8x8x4xf32>
    %c0_17 = arith.constant 0 : index
    %c0_18 = arith.constant 0 : index
    %c8 = arith.constant 8 : index
    %8 = vector.load %arg8[%c0_17, %c0_18, %c8] : memref<8x8x108xf32, #tpu.memory_space<vmem>>, vector<8x8x4xf32>
    tpu.vector_store %arg8[%c0_17, %c0_18, %c8], %7 {strides = array<i32>} : memref<8x8x108xf32, #tpu.memory_space<vmem>>, vector<8x8x4xf32>,
    %c0_19 = arith.constant 0 : index
    %c0_20 = arith.constant 0 : index
    %c1_21 = arith.constant 1 : index
    %c0_22 = arith.constant 0 : index
    %c0_23 = arith.constant 0 : index
    %9 = vector.load %arg2[%c0_19, %c0_20, %c1_21, %c0_22, %c0_23] : memref<1x1x10x10x4xf32, #tpu.memory_space<vmem>>, vector<1x1x8x8x4xf32>
    %10 = vector.shape_cast %9 : vector<1x1x8x8x4xf32> to vector<8x8x4xf32>
    %c0_24 = arith.constant 0 : index
    %c0_25 = arith.constant 0 : index
    %c12 = arith.constant 12 : index
    %11 = vector.load %arg8[%c0_24, %c0_25, %c12] : memref<8x8x108xf32, #tpu.memory_space<vmem>>, vector<8x8x4xf32>
    tpu.vector_store %arg8[%c0_24, %c0_25, %c12], %10 {strides = array<i32>} : memref<8x8x108xf32, #tpu.memory_space<vmem>>, vector<8x8x4xf32>,
    %c0_26 = arith.constant 0 : index
    %c0_27 = arith.constant 0 : index
    %c1_28 = arith.constant 1 : index
    %c1_29 = arith.constant 1 : index
    %c0_30 = arith.constant 0 : index
    %12 = vector.load %arg2[%c0_26, %c0_27, %c1_28, %c1_29, %c0_30] : memref<1x1x10x10x4xf32, #tpu.memory_space<vmem>>, vector<1x1x8x8x4xf32>
    %13 = vector.shape_cast %12 : vector<1x1x8x8x4xf32> to vector<8x8x4xf32>
    %c0_31 = arith.constant 0 : index
    %c0_32 = arith.constant 0 : index
    %c16 = arith.constant 16 : index
    %14 = vector.load %arg8[%c0_31, %c0_32, %c16] : memref<8x8x108xf32, #tpu.memory_space<vmem>>, vector<8x8x4xf32>
    tpu.vector_store %arg8[%c0_31, %c0_32, %c16], %13 {strides = array<i32>} : memref<8x8x108xf32, #tpu.memory_space<vmem>>, vector<8x8x4xf32>,
    %c0_33 = arith.constant 0 : index
    %c0_34 = arith.constant 0 : index
    %c1_35 = arith.constant 1 : index
    %c2_36 = arith.constant 2 : index
    %c0_37 = arith.constant 0 : index
    %15 = vector.load %arg2[%c0_33, %c0_34, %c1_35, %c2_36, %c0_37] : memref<1x1x10x10x4xf32, #tpu.memory_space<vmem>>, vector<1x1x8x8x4xf32>
    %16 = vector.shape_cast %15 : vector<1x1x8x8x4xf32> to vector<8x8x4xf32>
    %c0_38 = arith.constant 0 : index
    %c0_39 = arith.constant 0 : index
    %c20 = arith.constant 20 : index
    %17 = vector.load %arg8[%c0_38, %c0_39, %c20] : memref<8x8x108xf32, #tpu.memory_space<vmem>>, vector<8x8x4xf32>
    tpu.vector_store %arg8[%c0_38, %c0_39, %c20], %16 {strides = array<i32>} : memref<8x8x108xf32, #tpu.memory_space<vmem>>, vector<8x8x4xf32>,
    %c0_40 = arith.constant 0 : index
    %c0_41 = arith.constant 0 : index
    %c2_42 = arith.constant 2 : index
    %c0_43 = arith.constant 0 : index
    %c0_44 = arith.constant 0 : index
    %18 = vector.load %arg2[%c0_40, %c0_41, %c2_42, %c0_43, %c0_44] : memref<1x1x10x10x4xf32, #tpu.memory_space<vmem>>, vector<1x1x8x8x4xf32>
    %19 = vector.shape_cast %18 : vector<1x1x8x8x4xf32> to vector<8x8x4xf32>
    %c0_45 = arith.constant 0 : index
    %c0_46 = arith.constant 0 : index
    %c24 = arith.constant 24 : index
    %20 = vector.load %arg8[%c0_45, %c0_46, %c24] : memref<8x8x108xf32, #tpu.memory_space<vmem>>, vector<8x8x4xf32>
    tpu.vector_store %arg8[%c0_45, %c0_46, %c24], %19 {strides = array<i32>} : memref<8x8x108xf32, #tpu.memory_space<vmem>>, vector<8x8x4xf32>,
    %c0_47 = arith.constant 0 : index
    %c0_48 = arith.constant 0 : index
    %c2_49 = arith.constant 2 : index
    %c1_50 = arith.constant 1 : index
    %c0_51 = arith.constant 0 : index
    %21 = vector.load %arg2[%c0_47, %c0_48, %c2_49, %c1_50, %c0_51] : memref<1x1x10x10x4xf32, #tpu.memory_space<vmem>>, vector<1x1x8x8x4xf32>
    %22 = vector.shape_cast %21 : vector<1x1x8x8x4xf32> to vector<8x8x4xf32>
    %c0_52 = arith.constant 0 : index
    %c0_53 = arith.constant 0 : index
    %c28 = arith.constant 28 : index
    %23 = vector.load %arg8[%c0_52, %c0_53, %c28] : memref<8x8x108xf32, #tpu.memory_space<vmem>>, vector<8x8x4xf32>
    tpu.vector_store %arg8[%c0_52, %c0_53, %c28], %22 {strides = array<i32>} : memref<8x8x108xf32, #tpu.memory_space<vmem>>, vector<8x8x4xf32>,
    %c0_54 = arith.constant 0 : index
    %c0_55 = arith.constant 0 : index
    %c2_56 = arith.constant 2 : index
    %c2_57 = arith.constant 2 : index
    %c0_58 = arith.constant 0 : index
    %24 = vector.load %arg2[%c0_54, %c0_55, %c2_56, %c2_57, %c0_58] : memref<1x1x10x10x4xf32, #tpu.memory_space<vmem>>, vector<1x1x8x8x4xf32>
    %25 = vector.shape_cast %24 : vector<1x1x8x8x4xf32> to vector<8x8x4xf32>
    %c0_59 = arith.constant 0 : index
    %c0_60 = arith.constant 0 : index
    %c32 = arith.constant 32 : index
    %26 = vector.load %arg8[%c0_59, %c0_60, %c32] : memref<8x8x108xf32, #tpu.memory_space<vmem>>, vector<8x8x4xf32>
    tpu.vector_store %arg8[%c0_59, %c0_60, %c32], %25 {strides = array<i32>} : memref<8x8x108xf32, #tpu.memory_space<vmem>>, vector<8x8x4xf32>,
    %c0_61 = arith.constant 0 : index
    %c0_62 = arith.constant 0 : index
    %c0_63 = arith.constant 0 : index
    %c0_64 = arith.constant 0 : index
    %c0_65 = arith.constant 0 : index
    %27 = vector.load %arg3[%c0_61, %c0_62, %c0_63, %c0_64, %c0_65] : memref<1x1x10x10x4xf32, #tpu.memory_space<vmem>>, vector<1x1x8x8x4xf32>
    %28 = vector.shape_cast %27 : vector<1x1x8x8x4xf32> to vector<8x8x4xf32>
    %c0_66 = arith.constant 0 : index
    %c0_67 = arith.constant 0 : index
    %c36 = arith.constant 36 : index
    %29 = vector.load %arg8[%c0_66, %c0_67, %c36] : memref<8x8x108xf32, #tpu.memory_space<vmem>>, vector<8x8x4xf32>
    tpu.vector_store %arg8[%c0_66, %c0_67, %c36], %28 {strides = array<i32>} : memref<8x8x108xf32, #tpu.memory_space<vmem>>, vector<8x8x4xf32>,
    %c0_68 = arith.constant 0 : index
    %c0_69 = arith.constant 0 : index
    %c0_70 = arith.constant 0 : index
    %c1_71 = arith.constant 1 : index
    %c0_72 = arith.constant 0 : index
    %30 = vector.load %arg3[%c0_68, %c0_69, %c0_70, %c1_71, %c0_72] : memref<1x1x10x10x4xf32, #tpu.memory_space<vmem>>, vector<1x1x8x8x4xf32>
    %31 = vector.shape_cast %30 : vector<1x1x8x8x4xf32> to vector<8x8x4xf32>
    %c0_73 = arith.constant 0 : index
    %c0_74 = arith.constant 0 : index
    %c40 = arith.constant 40 : index
    %32 = vector.load %arg8[%c0_73, %c0_74, %c40] : memref<8x8x108xf32, #tpu.memory_space<vmem>>, vector<8x8x4xf32>
    tpu.vector_store %arg8[%c0_73, %c0_74, %c40], %31 {strides = array<i32>} : memref<8x8x108xf32, #tpu.memory_space<vmem>>, vector<8x8x4xf32>,
    %c0_75 = arith.constant 0 : index
    %c0_76 = arith.constant 0 : index
    %c0_77 = arith.constant 0 : index
    %c2_78 = arith.constant 2 : index
    %c0_79 = arith.constant 0 : index
    %33 = vector.load %arg3[%c0_75, %c0_76, %c0_77, %c2_78, %c0_79] : memref<1x1x10x10x4xf32, #tpu.memory_space<vmem>>, vector<1x1x8x8x4xf32>
    %34 = vector.shape_cast %33 : vector<1x1x8x8x4xf32> to vector<8x8x4xf32>
    %c0_80 = arith.constant 0 : index
    %c0_81 = arith.constant 0 : index
    %c44 = arith.constant 44 : index
    %35 = vector.load %arg8[%c0_80, %c0_81, %c44] : memref<8x8x108xf32, #tpu.memory_space<vmem>>, vector<8x8x4xf32>
    tpu.vector_store %arg8[%c0_80, %c0_81, %c44], %34 {strides = array<i32>} : memref<8x8x108xf32, #tpu.memory_space<vmem>>, vector<8x8x4xf32>,
    %c0_82 = arith.constant 0 : index
    %c0_83 = arith.constant 0 : index
    %c1_84 = arith.constant 1 : index
    %c0_85 = arith.constant 0 : index
    %c0_86 = arith.constant 0 : index
    %36 = vector.load %arg3[%c0_82, %c0_83, %c1_84, %c0_85, %c0_86] : memref<1x1x10x10x4xf32, #tpu.memory_space<vmem>>, vector<1x1x8x8x4xf32>
    %37 = vector.shape_cast %36 : vector<1x1x8x8x4xf32> to vector<8x8x4xf32>
    %c0_87 = arith.constant 0 : index
    %c0_88 = arith.constant 0 : index
    %c48 = arith.constant 48 : index
    %38 = vector.load %arg8[%c0_87, %c0_88, %c48] : memref<8x8x108xf32, #tpu.memory_space<vmem>>, vector<8x8x4xf32>
    tpu.vector_store %arg8[%c0_87, %c0_88, %c48], %37 {strides = array<i32>} : memref<8x8x108xf32, #tpu.memory_space<vmem>>, vector<8x8x4xf32>,
    %c0_89 = arith.constant 0 : index
    %c0_90 = arith.constant 0 : index
    %c1_91 = arith.constant 1 : index
    %c1_92 = arith.constant 1 : index
    %c0_93 = arith.constant 0 : index
    %39 = vector.load %arg3[%c0_89, %c0_90, %c1_91, %c1_92, %c0_93] : memref<1x1x10x10x4xf32, #tpu.memory_space<vmem>>, vector<1x1x8x8x4xf32>
    %40 = vector.shape_cast %39 : vector<1x1x8x8x4xf32> to vector<8x8x4xf32>
    %c0_94 = arith.constant 0 : index
    %c0_95 = arith.constant 0 : index
    %c52 = arith.constant 52 : index
    %41 = vector.load %arg8[%c0_94, %c0_95, %c52] : memref<8x8x108xf32, #tpu.memory_space<vmem>>, vector<8x8x4xf32>
    tpu.vector_store %arg8[%c0_94, %c0_95, %c52], %40 {strides = array<i32>} : memref<8x8x108xf32, #tpu.memory_space<vmem>>, vector<8x8x4xf32>,
    %c0_96 = arith.constant 0 : index
    %c0_97 = arith.constant 0 : index
    %c1_98 = arith.constant 1 : index
    %c2_99 = arith.constant 2 : index
    %c0_100 = arith.constant 0 : index
    %42 = vector.load %arg3[%c0_96, %c0_97, %c1_98, %c2_99, %c0_100] : memref<1x1x10x10x4xf32, #tpu.memory_space<vmem>>, vector<1x1x8x8x4xf32>
    %43 = vector.shape_cast %42 : vector<1x1x8x8x4xf32> to vector<8x8x4xf32>
    %c0_101 = arith.constant 0 : index
    %c0_102 = arith.constant 0 : index
    %c56 = arith.constant 56 : index
    %44 = vector.load %arg8[%c0_101, %c0_102, %c56] : memref<8x8x108xf32, #tpu.memory_space<vmem>>, vector<8x8x4xf32>
    tpu.vector_store %arg8[%c0_101, %c0_102, %c56], %43 {strides = array<i32>} : memref<8x8x108xf32, #tpu.memory_space<vmem>>, vector<8x8x4xf32>,
    %c0_103 = arith.constant 0 : index
    %c0_104 = arith.constant 0 : index
    %c2_105 = arith.constant 2 : index
    %c0_106 = arith.constant 0 : index
    %c0_107 = arith.constant 0 : index
    %45 = vector.load %arg3[%c0_103, %c0_104, %c2_105, %c0_106, %c0_107] : memref<1x1x10x10x4xf32, #tpu.memory_space<vmem>>, vector<1x1x8x8x4xf32>
    %46 = vector.shape_cast %45 : vector<1x1x8x8x4xf32> to vector<8x8x4xf32>
    %c0_108 = arith.constant 0 : index
    %c0_109 = arith.constant 0 : index
    %c60 = arith.constant 60 : index
    %47 = vector.load %arg8[%c0_108, %c0_109, %c60] : memref<8x8x108xf32, #tpu.memory_space<vmem>>, vector<8x8x4xf32>
    tpu.vector_store %arg8[%c0_108, %c0_109, %c60], %46 {strides = array<i32>} : memref<8x8x108xf32, #tpu.memory_space<vmem>>, vector<8x8x4xf32>,
    %c0_110 = arith.constant 0 : index
    %c0_111 = arith.constant 0 : index
    %c2_112 = arith.constant 2 : index
    %c1_113 = arith.constant 1 : index
    %c0_114 = arith.constant 0 : index
    %48 = vector.load %arg3[%c0_110, %c0_111, %c2_112, %c1_113, %c0_114] : memref<1x1x10x10x4xf32, #tpu.memory_space<vmem>>, vector<1x1x8x8x4xf32>
    %49 = vector.shape_cast %48 : vector<1x1x8x8x4xf32> to vector<8x8x4xf32>
    %c0_115 = arith.constant 0 : index
    %c0_116 = arith.constant 0 : index
    %c64 = arith.constant 64 : index
    %50 = vector.load %arg8[%c0_115, %c0_116, %c64] : memref<8x8x108xf32, #tpu.memory_space<vmem>>, vector<8x8x4xf32>
    tpu.vector_store %arg8[%c0_115, %c0_116, %c64], %49 {strides = array<i32>} : memref<8x8x108xf32, #tpu.memory_space<vmem>>, vector<8x8x4xf32>,
    %c0_117 = arith.constant 0 : index
    %c0_118 = arith.constant 0 : index
    %c2_119 = arith.constant 2 : index
    %c2_120 = arith.constant 2 : index
    %c0_121 = arith.constant 0 : index
    %51 = vector.load %arg3[%c0_117, %c0_118, %c2_119, %c2_120, %c0_121] : memref<1x1x10x10x4xf32, #tpu.memory_space<vmem>>, vector<1x1x8x8x4xf32>
    %52 = vector.shape_cast %51 : vector<1x1x8x8x4xf32> to vector<8x8x4xf32>
    %c0_122 = arith.constant 0 : index
    %c0_123 = arith.constant 0 : index
    %c68 = arith.constant 68 : index
    %53 = vector.load %arg8[%c0_122, %c0_123, %c68] : memref<8x8x108xf32, #tpu.memory_space<vmem>>, vector<8x8x4xf32>
    tpu.vector_store %arg8[%c0_122, %c0_123, %c68], %52 {strides = array<i32>} : memref<8x8x108xf32, #tpu.memory_space<vmem>>, vector<8x8x4xf32>,
    %c0_124 = arith.constant 0 : index
    %c0_125 = arith.constant 0 : index
    %c0_126 = arith.constant 0 : index
    %c0_127 = arith.constant 0 : index
    %c0_128 = arith.constant 0 : index
    %54 = vector.load %arg4[%c0_124, %c0_125, %c0_126, %c0_127, %c0_128] : memref<1x1x10x10x4xf32, #tpu.memory_space<vmem>>, vector<1x1x8x8x4xf32>
    %55 = vector.shape_cast %54 : vector<1x1x8x8x4xf32> to vector<8x8x4xf32>
    %c0_129 = arith.constant 0 : index
    %c0_130 = arith.constant 0 : index
    %c72 = arith.constant 72 : index
    %56 = vector.load %arg8[%c0_129, %c0_130, %c72] : memref<8x8x108xf32, #tpu.memory_space<vmem>>, vector<8x8x4xf32>
    tpu.vector_store %arg8[%c0_129, %c0_130, %c72], %55 {strides = array<i32>} : memref<8x8x108xf32, #tpu.memory_space<vmem>>, vector<8x8x4xf32>,
    %c0_131 = arith.constant 0 : index
    %c0_132 = arith.constant 0 : index
    %c0_133 = arith.constant 0 : index
    %c1_134 = arith.constant 1 : index
    %c0_135 = arith.constant 0 : index
    %57 = vector.load %arg4[%c0_131, %c0_132, %c0_133, %c1_134, %c0_135] : memref<1x1x10x10x4xf32, #tpu.memory_space<vmem>>, vector<1x1x8x8x4xf32>
    %58 = vector.shape_cast %57 : vector<1x1x8x8x4xf32> to vector<8x8x4xf32>
    %c0_136 = arith.constant 0 : index
    %c0_137 = arith.constant 0 : index
    %c76 = arith.constant 76 : index
    %59 = vector.load %arg8[%c0_136, %c0_137, %c76] : memref<8x8x108xf32, #tpu.memory_space<vmem>>, vector<8x8x4xf32>
    tpu.vector_store %arg8[%c0_136, %c0_137, %c76], %58 {strides = array<i32>} : memref<8x8x108xf32, #tpu.memory_space<vmem>>, vector<8x8x4xf32>,
    %c0_138 = arith.constant 0 : index
    %c0_139 = arith.constant 0 : index
    %c0_140 = arith.constant 0 : index
    %c2_141 = arith.constant 2 : index
    %c0_142 = arith.constant 0 : index
    %60 = vector.load %arg4[%c0_138, %c0_139, %c0_140, %c2_141, %c0_142] : memref<1x1x10x10x4xf32, #tpu.memory_space<vmem>>, vector<1x1x8x8x4xf32>
    %61 = vector.shape_cast %60 : vector<1x1x8x8x4xf32> to vector<8x8x4xf32>
    %c0_143 = arith.constant 0 : index
    %c0_144 = arith.constant 0 : index
    %c80 = arith.constant 80 : index
    %62 = vector.load %arg8[%c0_143, %c0_144, %c80] : memref<8x8x108xf32, #tpu.memory_space<vmem>>, vector<8x8x4xf32>
    tpu.vector_store %arg8[%c0_143, %c0_144, %c80], %61 {strides = array<i32>} : memref<8x8x108xf32, #tpu.memory_space<vmem>>, vector<8x8x4xf32>,
    %c0_145 = arith.constant 0 : index
    %c0_146 = arith.constant 0 : index
    %c1_147 = arith.constant 1 : index
    %c0_148 = arith.constant 0 : index
    %c0_149 = arith.constant 0 : index
    %63 = vector.load %arg4[%c0_145, %c0_146, %c1_147, %c0_148, %c0_149] : memref<1x1x10x10x4xf32, #tpu.memory_space<vmem>>, vector<1x1x8x8x4xf32>
    %64 = vector.shape_cast %63 : vector<1x1x8x8x4xf32> to vector<8x8x4xf32>
    %c0_150 = arith.constant 0 : index
    %c0_151 = arith.constant 0 : index
    %c84 = arith.constant 84 : index
    %65 = vector.load %arg8[%c0_150, %c0_151, %c84] : memref<8x8x108xf32, #tpu.memory_space<vmem>>, vector<8x8x4xf32>
    tpu.vector_store %arg8[%c0_150, %c0_151, %c84], %64 {strides = array<i32>} : memref<8x8x108xf32, #tpu.memory_space<vmem>>, vector<8x8x4xf32>,
    %c0_152 = arith.constant 0 : index
    %c0_153 = arith.constant 0 : index
    %c1_154 = arith.constant 1 : index
    %c1_155 = arith.constant 1 : index
    %c0_156 = arith.constant 0 : index
    %66 = vector.load %arg4[%c0_152, %c0_153, %c1_154, %c1_155, %c0_156] : memref<1x1x10x10x4xf32, #tpu.memory_space<vmem>>, vector<1x1x8x8x4xf32>
    %67 = vector.shape_cast %66 : vector<1x1x8x8x4xf32> to vector<8x8x4xf32>
    %c0_157 = arith.constant 0 : index
    %c0_158 = arith.constant 0 : index
    %c88 = arith.constant 88 : index
    %68 = vector.load %arg8[%c0_157, %c0_158, %c88] : memref<8x8x108xf32, #tpu.memory_space<vmem>>, vector<8x8x4xf32>
    tpu.vector_store %arg8[%c0_157, %c0_158, %c88], %67 {strides = array<i32>} : memref<8x8x108xf32, #tpu.memory_space<vmem>>, vector<8x8x4xf32>,
    %c0_159 = arith.constant 0 : index
    %c0_160 = arith.constant 0 : index
    %c1_161 = arith.constant 1 : index
    %c2_162 = arith.constant 2 : index
    %c0_163 = arith.constant 0 : index
    %69 = vector.load %arg4[%c0_159, %c0_160, %c1_161, %c2_162, %c0_163] : memref<1x1x10x10x4xf32, #tpu.memory_space<vmem>>, vector<1x1x8x8x4xf32>
    %70 = vector.shape_cast %69 : vector<1x1x8x8x4xf32> to vector<8x8x4xf32>
    %c0_164 = arith.constant 0 : index
    %c0_165 = arith.constant 0 : index
    %c92 = arith.constant 92 : index
    %71 = vector.load %arg8[%c0_164, %c0_165, %c92] : memref<8x8x108xf32, #tpu.memory_space<vmem>>, vector<8x8x4xf32>
    tpu.vector_store %arg8[%c0_164, %c0_165, %c92], %70 {strides = array<i32>} : memref<8x8x108xf32, #tpu.memory_space<vmem>>, vector<8x8x4xf32>,
    %c0_166 = arith.constant 0 : index
    %c0_167 = arith.constant 0 : index
    %c2_168 = arith.constant 2 : index
    %c0_169 = arith.constant 0 : index
    %c0_170 = arith.constant 0 : index
    %72 = vector.load %arg4[%c0_166, %c0_167, %c2_168, %c0_169, %c0_170] : memref<1x1x10x10x4xf32, #tpu.memory_space<vmem>>, vector<1x1x8x8x4xf32>
    %73 = vector.shape_cast %72 : vector<1x1x8x8x4xf32> to vector<8x8x4xf32>
    %c0_171 = arith.constant 0 : index
    %c0_172 = arith.constant 0 : index
    %c96 = arith.constant 96 : index
    %74 = vector.load %arg8[%c0_171, %c0_172, %c96] : memref<8x8x108xf32, #tpu.memory_space<vmem>>, vector<8x8x4xf32>
    tpu.vector_store %arg8[%c0_171, %c0_172, %c96], %73 {strides = array<i32>} : memref<8x8x108xf32, #tpu.memory_space<vmem>>, vector<8x8x4xf32>,
    %c0_173 = arith.constant 0 : index
    %c0_174 = arith.constant 0 : index
    %c2_175 = arith.constant 2 : index
    %c1_176 = arith.constant 1 : index
    %c0_177 = arith.constant 0 : index
    %75 = vector.load %arg4[%c0_173, %c0_174, %c2_175, %c1_176, %c0_177] : memref<1x1x10x10x4xf32, #tpu.memory_space<vmem>>, vector<1x1x8x8x4xf32>
    %76 = vector.shape_cast %75 : vector<1x1x8x8x4xf32> to vector<8x8x4xf32>
    %c0_178 = arith.constant 0 : index
    %c0_179 = arith.constant 0 : index
    %c100 = arith.constant 100 : index
    %77 = vector.load %arg8[%c0_178, %c0_179, %c100] : memref<8x8x108xf32, #tpu.memory_space<vmem>>, vector<8x8x4xf32>
    tpu.vector_store %arg8[%c0_178, %c0_179, %c100], %76 {strides = array<i32>} : memref<8x8x108xf32, #tpu.memory_space<vmem>>, vector<8x8x4xf32>,
    %c0_180 = arith.constant 0 : index
    %c0_181 = arith.constant 0 : index
    %c2_182 = arith.constant 2 : index
    %c2_183 = arith.constant 2 : index
    %c0_184 = arith.constant 0 : index
    %78 = vector.load %arg4[%c0_180, %c0_181, %c2_182, %c2_183, %c0_184] : memref<1x1x10x10x4xf32, #tpu.memory_space<vmem>>, vector<1x1x8x8x4xf32>
    %79 = vector.shape_cast %78 : vector<1x1x8x8x4xf32> to vector<8x8x4xf32>
    %c0_185 = arith.constant 0 : index
    %c0_186 = arith.constant 0 : index
    %c104 = arith.constant 104 : index
    %80 = vector.load %arg8[%c0_185, %c0_186, %c104] : memref<8x8x108xf32, #tpu.memory_space<vmem>>, vector<8x8x4xf32>
    tpu.vector_store %arg8[%c0_185, %c0_186, %c104], %79 {strides = array<i32>} : memref<8x8x108xf32, #tpu.memory_space<vmem>>, vector<8x8x4xf32>,
    %c0_187 = arith.constant 0 : index
    %c0_188 = arith.constant 0 : index
    %c0_189 = arith.constant 0 : index
    %81 = vector.load %arg8[%c0_187, %c0_188, %c0_189] : memref<8x8x108xf32, #tpu.memory_space<vmem>>, vector<8x8x108xf32>
    %82 = vector.shape_cast %81 : vector<8x8x108xf32> to vector<64x108xf32>
    %c0_190 = arith.constant 0 : index
    %c0_191 = arith.constant 0 : index
    %83 = vector.load %arg5[%c0_190, %c0_191] : memref<108x32xf32, #tpu.memory_space<vmem>>, vector<108x32xf32>
    %cst = arith.constant dense<0.000000e+00> : vector<64x32xf32>
    %84 = tpu.matmul %82, %83, %cst {dimension_numbers = #tpu.dot_dimension_numbers<[1], [0], [0], [1], [0, 0, 1, 1], [], []>} : vector<64x108xf32>, vector<108x32xf32>, vector<64x32xf32> -> vector<64x32xf32>
    %c0_192 = arith.constant 0 : index
    %c0_193 = arith.constant 0 : index
    %85 = vector.load %arg6[%c0_192, %c0_193] : memref<1x32xf32, #tpu.memory_space<vmem>>, vector<1x32xf32>
    %86 = vector.broadcast %85 : vector<1x32xf32> to vector<64x32xf32>
    %87 = arith.addf %84, %86 : vector<64x32xf32>
    %c0_194 = arith.constant 0 : index
    %c0_195 = arith.constant 0 : index
    %c0_196 = arith.constant 0 : index
    %c0_197 = arith.constant 0 : index
    %88 = vector.load %arg7[%c0_194, %c0_195, %c0_196, %c0_197] : memref<1x1x64x32xf32, #tpu.memory_space<vmem>>, vector<1x1x64x32xf32>
    %89 = vector.shape_cast %88 : vector<1x1x64x32xf32> to vector<64x32xf32>
    %90 = vector.shape_cast %87 : vector<64x32xf32> to vector<1x1x64x32xf32>
    tpu.vector_store %arg7[%c0_194, %c0_195, %c0_196, %c0_197], %90 {strides = array<i32>} : memref<1x1x64x32xf32, #tpu.memory_space<vmem>>, vector<1x1x64x32xf32>,
    return
  }
  func.func @transform_0(%arg0: i32, %arg1: i32) -> (i32, i32, i32, i32, i32) {
    %c0_i32 = arith.constant 0 : i32
    %c0_i32_0 = arith.constant 0 : i32
    %c0_i32_1 = arith.constant 0 : i32
    %c0_i32_2 = arith.constant 0 : i32
    return %arg0, %arg1, %c0_i32, %c0_i32_0, %c0_i32_1 : i32, i32, i32, i32, i32
  }
  func.func @transform_1(%arg0: i32, %arg1: i32) -> (i32, i32, i32, i32, i32) {
    %c1_i32 = arith.constant 1 : i32
    %0 = arith.addi %arg1, %c1_i32 : i32
    %c0_i32 = arith.constant 0 : i32
    %c0_i32_0 = arith.constant 0 : i32
    %c0_i32_1 = arith.constant 0 : i32
    %c0_i32_2 = arith.constant 0 : i32
    return %arg0, %0, %c0_i32, %c0_i32_0, %c0_i32_1 : i32, i32, i32, i32, i32
  }
  func.func @transform_2(%arg0: i32, %arg1: i32) -> (i32, i32, i32, i32, i32) {
    %c2_i32 = arith.constant 2 : i32
    %0 = arith.addi %arg1, %c2_i32 : i32
    %c0_i32 = arith.constant 0 : i32
    %c0_i32_0 = arith.constant 0 : i32
    %c0_i32_1 = arith.constant 0 : i32
    %c0_i32_2 = arith.constant 0 : i32
    return %arg0, %0, %c0_i32, %c0_i32_0, %c0_i32_1 : i32, i32, i32, i32, i32
  }
  func.func @transform_3(%arg0: i32, %arg1: i32) -> (i32, i32) {
    %c0_i32 = arith.constant 0 : i32
    %c0_i32_0 = arith.constant 0 : i32
    %c0_i32_1 = arith.constant 0 : i32
    return %c0_i32, %c0_i32_0 : i32, i32
  }
  func.func @transform_4(%arg0: i32, %arg1: i32) -> (i32, i32) {
    %c0_i32 = arith.constant 0 : i32
    %c0_i32_0 = arith.constant 0 : i32
    %c0_i32_1 = arith.constant 0 : i32
    return %c0_i32, %c0_i32_0 : i32, i32
  }
  func.func @transform_5(%arg0: i32, %arg1: i32) -> (i32, i32, i32, i32) {
    %c0_i32 = arith.constant 0 : i32
    %c0_i32_0 = arith.constant 0 : i32
    %c0_i32_1 = arith.constant 0 : i32
    return %arg0, %arg1, %c0_i32, %c0_i32_0 : i32, i32, i32, i32
  }
}

</mosaic_0001>

<llo_original>
// kernel: tpu_custom_call.1
$region0: #{tpu_custom_call.1}
  #allocation0 [shape = 'u32[]', space=smem, size = 0x4, offset = 0x4, fixed_abs, tag = 'smem constant byte address 0x4 - core index']
  #allocation1 [shape = 'u32[144,128]{1,0:T(1,128)}', space=vmem, size = 0x12000, scoped, tag = 'internal scratch']
  #allocation2 [shape = 'f32[8,8,108]{2,1,0:T(8,128)}', space=vmem, size = 0x8000, scoped, tag = 'scratch operand']
  %s0 = inlined_call_operand.vmem [shape: f32[2,10,10,10,4], index: 0, kind: input, shape index: {}]
  %s1 = inlined_call_operand.vmem [shape: f32[2,10,10,10,4], index: 1, kind: input, shape index: {}]
  %s2 = inlined_call_operand.vmem [shape: f32[2,10,10,10,4], index: 2, kind: input, shape index: {}]
  %s3 = inlined_call_operand.vmem [shape: f32[108,32], index: 3, kind: input, shape index: {}]
  %s4 = inlined_call_operand.vmem [shape: f32[1,32], index: 4, kind: input, shape index: {}]
  %s5 = inlined_call_operand.vmem [shape: f32[2,8,64,32], index: 5, kind: output, shape index: {}]
  %s6 = sld [smem:[#allocation0]]
  $region53: #{tpu_custom_call.1} parent=0
    _
  %s8 = ssub.s32 1, %s6
  %s9 = scalar_select 0, %s8, %s6
  loop: start=0, step=1, limit=18
  $region2: #{tpu_custom_call.1} parent=0 // loop_pre_header
    _
  $region3: #{tpu_custom_call.1} parent=0 // loop_header
    %s11 = sphi 0, %s15
    %p12 = scmp.ge.s32.totalorder %s11, 18
    %s18 = sphi 0, %s30
    %s19 = sphi 0, %s26
    %s20 = sphi 0, %s18
    %s21 = sphi 0, %s19
    %s22 = sphi 0, %s20
    %s23 = sphi 0, %s21
    %s35 = sphi 0, %s37
    %s38 = sphi 0, %s35
    %s39 = sphi 0, %s38
    %s55 = sphi 0, %s39
    %s65 = sphi 0, %s67
    %s68 = sphi 0, %s65
    %s69 = sphi 0, %s68
    %s85 = sphi 0, %s69
    %s95 = sphi 0, %s97
    %s98 = sphi 0, %s95
    %s99 = sphi 0, %s98
    %s115 = sphi 0, %s99
    %s119 = sphi 0, %s119
    %s121 = sphi 0, %s119
    %s122 = sphi 0, %s121
    %s136 = sphi 0, %s122
    %s140 = sphi 0, %s140
    %s142 = sphi 0, %s140
    %s143 = sphi 0, %s142
    %s157 = sphi 0, %s143
    %s165 = sphi 0, %s167
    %s168 = sphi 0, %s165
    %s169 = sphi 0, %s168
    %s185 = sphi 0, %s169
  $region4: #{tpu_custom_call.1} parent=0 // loop_header_branch
    %14 = sbr.rel (%p12) target = $region8
  $region5: #{tpu_custom_call.1} parent=0 // loop_body
    %s16 = ssub.s32 %s11, 1
    %s17 = ssub.s32 %s11, 2
    %s24 = sadd.s32 1, %s19
    %p25 = scmp.ge.s32.totalorder %s24, 8
    %s26 = scalar_select %p25, 0, %s24
    %s27 = sadd.s32 1, %s18
    %s28 = scalar_select %p25, %s27, %s18
    %p29 = scmp.ge.s32.totalorder %s28, 2
    %s30 = scalar_select %p29, 0, %s28
    %s31 = ssub.s32 %s18, %s30
    %s32 = ssub.s32 %s19, %s26
    %s33 = sor.u32 %s31, %s32
    %p34 = scmp.eq.s32.totalorder %s33, 0
    %s36 = sadd.s32 %s35, 1
    %s37 = scalar_select %p34, %s35, %s36
    %p40 = pneg %p34
    %p41 = scmp.eq.s32.totalorder %s11, 15
    %p42 = por %p40, %p41
    %p43 = scmp.ne.s32.totalorder %s35, %s38
    %p44 = scmp.eq.s32.totalorder %s11, 0
    %p45 = por %p43, %p44
    %p46 = scmp.ne.s32.totalorder %s35, %s38
    %p47 = scmp.eq.s32.totalorder %s16, 15
    %p48 = por %p46, %p47
    %p49 = scmp.ne.s32.totalorder %s38, %s39
    %p50 = scmp.eq.s32.totalorder %s16, 0
    %p51 = por %p49, %p50
    %p52 = scmp.ne.s32.totalorder %s38, %s39
    %p53 = scmp.eq.s32.totalorder %s17, 15
    %p54 = por %p52, %p53
    %p56 = scmp.ne.s32.totalorder %s39, %s55
    %p57 = scmp.eq.s32.totalorder %s17, 0
    %p58 = por %p56, %p57
    %s59 = sadd.s32 %s19, 1
    %s60 = sadd.s32 %s26, 1
    %s61 = ssub.s32 %s18, %s30
    %s62 = ssub.s32 %s59, %s60
    %s63 = sor.u32 %s61, %s62
    %p64 = scmp.eq.s32.totalorder %s63, 0
    %s66 = sadd.s32 %s65, 1
    %s67 = scalar_select %p64, %s65, %s66
    %p70 = pneg %p64
    %p71 = scmp.eq.s32.totalorder %s11, 15
    %p72 = por %p70, %p71
    %p73 = scmp.ne.s32.totalorder %s65, %s68
    %p74 = scmp.eq.s32.totalorder %s11, 0
    %p75 = por %p73, %p74
    %p76 = scmp.ne.s32.totalorder %s65, %s68
    %p77 = scmp.eq.s32.totalorder %s16, 15
    %p78 = por %p76, %p77
    %p79 = scmp.ne.s32.totalorder %s68, %s69
    %p80 = scmp.eq.s32.totalorder %s16, 0
    %p81 = por %p79, %p80
    %p82 = scmp.ne.s32.totalorder %s68, %s69
    %p83 = scmp.eq.s32.totalorder %s17, 15
    %p84 = por %p82, %p83
    %p86 = scmp.ne.s32.totalorder %s69, %s85
    %p87 = scmp.eq.s32.totalorder %s17, 0
    %p88 = por %p86, %p87
    %s89 = sadd.s32 %s19, 2
    %s90 = sadd.s32 %s26, 2
    %s91 = ssub.s32 %s18, %s30
    %s92 = ssub.s32 %s89, %s90
    %s93 = sor.u32 %s91, %s92
    %p94 = scmp.eq.s32.totalorder %s93, 0
    %s96 = sadd.s32 %s95, 1
    %s97 = scalar_select %p94, %s95, %s96
    %p100 = pneg %p94
    %p101 = scmp.eq.s32.totalorder %s11, 15
    %p102 = por %p100, %p101
    %p103 = scmp.ne.s32.totalorder %s95, %s98
    %p104 = scmp.eq.s32.totalorder %s11, 0
    %p105 = por %p103, %p104
    %p106 = scmp.ne.s32.totalorder %s95, %s98
    %p107 = scmp.eq.s32.totalorder %s16, 15
    %p108 = por %p106, %p107
    %p109 = scmp.ne.s32.totalorder %s98, %s99
    %p110 = scmp.eq.s32.totalorder %s16, 0
    %p111 = por %p109, %p110
    %p112 = scmp.ne.s32.totalorder %s98, %s99
    %p113 = scmp.eq.s32.totalorder %s17, 15
    %p114 = por %p112, %p113
    %p116 = scmp.ne.s32.totalorder %s99, %s115
    %p117 = scmp.eq.s32.totalorder %s17, 0
    %p118 = por %p116, %p117
    %s120 = sadd.s32 %s119, 1
    %p123 = scmp.eq.s32.totalorder %s11, 15
    %p124 = scmp.ne.s32.totalorder %s119, %s121
    %p125 = scmp.eq.s32.totalorder %s11, 0
    %p126 = por %p124, %p125
    %p127 = scmp.ne.s32.totalorder %s119, %s121
    %p128 = scmp.eq.s32.totalorder %s16, 15
    %p129 = por %p127, %p128
    %p130 = scmp.ne.s32.totalorder %s121, %s122
    %p131 = scmp.eq.s32.totalorder %s16, 0
    %p132 = por %p130, %p131
    %p133 = scmp.ne.s32.totalorder %s121, %s122
    %p134 = scmp.eq.s32.totalorder %s17, 15
    %p135 = por %p133, %p134
    %p137 = scmp.ne.s32.totalorder %s122, %s136
    %p138 = scmp.eq.s32.totalorder %s17, 0
    %p139 = por %p137, %p138
    %s141 = sadd.s32 %s140, 1
    %p144 = scmp.eq.s32.totalorder %s11, 15
    %p145 = scmp.ne.s32.totalorder %s140, %s142
    %p146 = scmp.eq.s32.totalorder %s11, 0
    %p147 = por %p145, %p146
    %p148 = scmp.ne.s32.totalorder %s140, %s142
    %p149 = scmp.eq.s32.totalorder %s16, 15
    %p150 = por %p148, %p149
    %p151 = scmp.ne.s32.totalorder %s142, %s143
    %p152 = scmp.eq.s32.totalorder %s16, 0
    %p153 = por %p151, %p152
    %p154 = scmp.ne.s32.totalorder %s142, %s143
    %p155 = scmp.eq.s32.totalorder %s17, 15
    %p156 = por %p154, %p155
    %p158 = scmp.ne.s32.totalorder %s143, %s157
    %p159 = scmp.eq.s32.totalorder %s17, 0
    %p160 = por %p158, %p159
    %s161 = ssub.s32 %s18, %s30
    %s162 = ssub.s32 %s19, %s26
    %s163 = sor.u32 %s161, %s162
    %p164 = scmp.eq.s32.totalorder %s163, 0
    %s166 = sadd.s32 %s165, 1
    %s167 = scalar_select %p164, %s165, %s166
    %p170 = pneg %p164
    %p171 = scmp.eq.s32.totalorder %s11, 15
    %p172 = por %p170, %p171
    %p173 = scmp.ne.s32.totalorder %s165, %s168
    %p174 = scmp.eq.s32.totalorder %s11, 0
    %p175 = por %p173, %p174
    %p176 = scmp.ne.s32.totalorder %s165, %s168
    %p177 = scmp.eq.s32.totalorder %s16, 15
    %p178 = por %p176, %p177
    %p179 = scmp.ne.s32.totalorder %s168, %s169
    %p180 = scmp.eq.s32.totalorder %s16, 0
    %p181 = por %p179, %p180
    %p182 = scmp.ne.s32.totalorder %s168, %s169
    %p183 = scmp.eq.s32.totalorder %s17, 15
    %p184 = por %p182, %p183
    %p186 = scmp.ne.s32.totalorder %s169, %s185
    %p187 = scmp.eq.s32.totalorder %s17, 0
    %p188 = por %p186, %p187
    %p189 = scmp.le.s32.totalorder 1, %s11
    %p190 = scmp.lt.s32.totalorder %s11, 17
    %p191 = pnand %p189, %p190
    %p192 = pneg %p191
    // Predicated region
    $region9: #{tpu_custom_call.1} parent=5 // pred_check
      _
    $region10: #{tpu_custom_call.1} parent=5 // pred_check_branch
      %194 = sbr.rel (%p191) target = $region12
    $region11: #{tpu_custom_call.1} parent=5 // pred_region
      %s195 = ssub.s32 %s11, 1
      // Predicated region
      $region13: #{tpu_custom_call.1} parent=11 // pred_check
        %p196 = pneg %p132
      $region14: #{tpu_custom_call.1} parent=11 // pred_check_branch
        %198 = sbr.rel (%p196) target = $region16
      $region15: #{tpu_custom_call.1} parent=11 // pred_region
        _
      $region16: #{tpu_custom_call.1} parent=11 // pred_fallthru
        _
      // Predicated region
      $region17: #{tpu_custom_call.1} parent=11 // pred_check
        %p199 = pneg %p153
      $region18: #{tpu_custom_call.1} parent=11 // pred_check_branch
        %201 = sbr.rel (%p199) target = $region20
      $region19: #{tpu_custom_call.1} parent=11 // pred_region
        _
      $region20: #{tpu_custom_call.1} parent=11 // pred_fallthru
        _
    $region12: #{tpu_custom_call.1} parent=5 // pred_fallthru
      _
    %p202 = scmp.lt.s32.totalorder %s11, 16
    // Predicated region
    $region21: #{tpu_custom_call.1} parent=5 // pred_check
      %p203 = pneg %p202
    $region22: #{tpu_custom_call.1} parent=5 // pred_check_branch
      %205 = sbr.rel (%p203) target = $region24
    $region23: #{tpu_custom_call.1} parent=5 // pred_region
      // Predicated region
      $region25: #{tpu_custom_call.1} parent=23 // pred_check
        %p206 = pneg %p45
      $region26: #{tpu_custom_call.1} parent=23 // pred_check_branch
        %208 = sbr.rel (%p206) target = $region28
      $region27: #{tpu_custom_call.1} parent=23 // pred_region
        %p209 = scmp.lt.s32.totalorder %s18, 1
        %s210 = scalar_select %p209, %s18, 1
        %p211 = scmp.lt.s32.totalorder %s19, 9
        %s212 = scalar_select %p211, %s19, 9
        %s213 = smul.addr %s212, 20
        %s214 = smul.addr %s210, 200
        %s215 = sadd.s32 %s213, %s214
        %s216 = smul.addr %s215, 8
        %s217 = scalar_lea.vmem %s0, %s216
      $region28: #{tpu_custom_call.1} parent=23 // pred_fallthru
        _
      // Predicated region
      $region29: #{tpu_custom_call.1} parent=23 // pred_check
        %p218 = pneg %p75
      $region30: #{tpu_custom_call.1} parent=23 // pred_check_branch
        %220 = sbr.rel (%p218) target = $region32
      $region31: #{tpu_custom_call.1} parent=23 // pred_region
        %s221 = sadd.s32 %s19, 1
        %p222 = scmp.lt.s32.totalorder %s18, 1
        %s223 = scalar_select %p222, %s18, 1
        %p224 = scmp.lt.s32.totalorder %s221, 9
        %s225 = scalar_select %p224, %s221, 9
        %s226 = smul.addr %s225, 20
        %s227 = smul.addr %s223, 200
        %s228 = sadd.s32 %s226, %s227
        %s229 = smul.addr %s228, 8
        %s230 = scalar_lea.vmem %s1, %s229
        %s231 = sadd.s32 %s19, 1
      $region32: #{tpu_custom_call.1} parent=23 // pred_fallthru
        _
      // Predicated region
      $region33: #{tpu_custom_call.1} parent=23 // pred_check
        %p232 = pneg %p105
      $region34: #{tpu_custom_call.1} parent=23 // pred_check_branch
        %234 = sbr.rel (%p232) target = $region36
      $region35: #{tpu_custom_call.1} parent=23 // pred_region
        %s235 = sadd.s32 %s19, 2
        %p236 = scmp.lt.s32.totalorder %s18, 1
        %s237 = scalar_select %p236, %s18, 1
        %p238 = scmp.lt.s32.totalorder %s235, 9
        %s239 = scalar_select %p238, %s235, 9
        %s240 = smul.addr %s239, 20
        %s241 = smul.addr %s237, 200
        %s242 = sadd.s32 %s240, %s241
        %s243 = smul.addr %s242, 8
        %s244 = scalar_lea.vmem %s2, %s243
        %s245 = sadd.s32 %s19, 2
      $region36: #{tpu_custom_call.1} parent=23 // pred_fallthru
        _
    $region24: #{tpu_custom_call.1} parent=5 // pred_fallthru
      _
    %p246 = scmp.le.s32.totalorder 1, %s11
    %p247 = scmp.lt.s32.totalorder %s11, 17
    %p248 = pnand %p246, %p247
    %p249 = pneg %p248
    // Predicated region
    $region37: #{tpu_custom_call.1} parent=5 // pred_check
      _
    $region38: #{tpu_custom_call.1} parent=5 // pred_check_branch
      %251 = sbr.rel (%p248) target = $region40
    $region39: #{tpu_custom_call.1} parent=5 // pred_region
      %s252 = ssub.s32 %s11, 1
      %p253 = scmp.lt.s32.totalorder %s20, 1
      %s254 = scalar_select %p253, %s20, 1
      %p255 = scmp.lt.s32.totalorder %s21, 9
      %s256 = scalar_select %p255, %s21, 9
      %s257 = smul.addr %s256, 20
      %s258 = smul.addr %s254, 200
      %s259 = sadd.s32 %s257, %s258
      %s260 = smul.addr %s259, 8
      %s261 = scalar_lea.vmem %s0, %s260
      %p262 = pneg %p51
      %p263 = pneg %p48
      %s264 = sadd.s32 %s21, 1
      %p265 = scmp.lt.s32.totalorder %s20, 1
      %s266 = scalar_select %p265, %s20, 1
      %p267 = scmp.lt.s32.totalorder %s264, 9
      %s268 = scalar_select %p267, %s264, 9
      %s269 = smul.addr %s268, 20
      %s270 = smul.addr %s266, 200
      %s271 = sadd.s32 %s269, %s270
      %s272 = smul.addr %s271, 8
      %s273 = scalar_lea.vmem %s1, %s272
      %p274 = pneg %p81
      %p275 = pneg %p78
      %s276 = sadd.s32 %s21, 2
      %p277 = scmp.lt.s32.totalorder %s20, 1
      %s278 = scalar_select %p277, %s20, 1
      %p279 = scmp.lt.s32.totalorder %s276, 9
      %s280 = scalar_select %p279, %s276, 9
      %s281 = smul.addr %s280, 20
      %s282 = smul.addr %s278, 200
      %s283 = sadd.s32 %s281, %s282
      %s284 = smul.addr %s283, 8
      %s285 = scalar_lea.vmem %s2, %s284
      %p286 = pneg %p111
      %p287 = pneg %p108
      %p288 = pneg %p132
      %p289 = pneg %p129
      %p290 = pneg %p153
      %p291 = pneg %p150
      %p292 = pneg %p181
      %p293 = pneg %p178
      %p294 = scmp.lt.s32.totalorder %s20, 1
      %s295 = scalar_select %p294, %s20, 1
      %p296 = scmp.lt.s32.totalorder %s21, 7
      %s297 = scalar_select %p296, %s21, 7
      %s298 = smul.addr %s297, 8
      %s299 = smul.addr %s295, 64
      %s300 = sadd.s32 %s298, %s299
      %s301 = smul.addr %s300, 8
      %s302 = scalar_lea.vmem %s5, %s301
      %p303 = scmp.lt.s32.totalorder %s20, 1
      %s304 = scalar_select %p303, %s20, 1
      %p305 = scmp.lt.s32.totalorder %s21, 9
      %s306 = scalar_select %p305, %s21, 9
      %s307 = smul.addr %s306, 20
      %s308 = smul.addr %s304, 200
      %s309 = sadd.s32 %s307, %s308
      %s310 = smul.addr %s309, 8
      %s311 = scalar_lea.vmem %s0, %s310
      %s312 = sadd.s32 %s21, 1
      %p313 = scmp.lt.s32.totalorder %s20, 1
      %s314 = scalar_select %p313, %s20, 1
      %p315 = scmp.lt.s32.totalorder %s312, 9
      %s316 = scalar_select %p315, %s312, 9
      %s317 = smul.addr %s316, 20
      %s318 = smul.addr %s314, 200
      %s319 = sadd.s32 %s317, %s318
      %s320 = smul.addr %s319, 8
      %s321 = scalar_lea.vmem %s1, %s320
      %s322 = sadd.s32 %s21, 1
      %s323 = sadd.s32 %s21, 2
      %p324 = scmp.lt.s32.totalorder %s20, 1
      %s325 = scalar_select %p324, %s20, 1
      %p326 = scmp.lt.s32.totalorder %s323, 9
      %s327 = scalar_select %p326, %s323, 9
      %s328 = smul.addr %s327, 20
      %s329 = smul.addr %s325, 200
      %s330 = sadd.s32 %s328, %s329
      %s331 = smul.addr %s330, 8
      %s332 = scalar_lea.vmem %s2, %s331
      %s333 = sadd.s32 %s21, 2
      %p334 = scmp.lt.s32.totalorder %s20, 1
      %s335 = scalar_select %p334, %s20, 1
      %p336 = scmp.lt.s32.totalorder %s21, 7
      %s337 = scalar_select %p336, %s21, 7
      %s338 = smul.addr %s337, 8
      %s339 = smul.addr %s335, 64
      %s340 = sadd.s32 %s338, %s339
      %s341 = smul.addr %s340, 8
      %s342 = scalar_lea.vmem %s5, %s341
      %v343 = vld [vmem:[%s311] sm:$0xff]
      %v344 = vld [vmem:[%s311 + $0x10] sm:$0xff]
      %v345 = vld [vmem:[%s311 + $0x20] sm:$0xff]
      %v346 = vld [vmem:[%s311 + $0x30] sm:$0xff]
      %v347 = vld [vmem:[%s311 + $0x40] sm:$0xff]
      %v348 = vld [vmem:[%s311 + $0x50] sm:$0xff]
      %v349 = vld [vmem:[%s311 + $0x60] sm:$0xff]
      %v350 = vld [vmem:[%s311 + $0x70] sm:$0xff]
      %vm351 = vcmask 31744
      %352 = vst.msk [vmem:[#allocation2] sm:$0xff] %vm351, %v343
      %353 = vst.msk [vmem:[#allocation2 + $0x8] sm:$0xff] %vm351, %v344
      %354 = vst.msk [vmem:[#allocation2 + $0x10] sm:$0xff] %vm351, %v345
      %355 = vst.msk [vmem:[#allocation2 + $0x18] sm:$0xff] %vm351, %v346
      %356 = vst.msk [vmem:[#allocation2 + $0x20] sm:$0xff] %vm351, %v347
      %357 = vst.msk [vmem:[#allocation2 + $0x28] sm:$0xff] %vm351, %v348
      %358 = vst.msk [vmem:[#allocation2 + $0x30] sm:$0xff] %vm351, %v349
      %359 = vst.msk [vmem:[#allocation2 + $0x38] sm:$0xff] %vm351, %v350
      %v360 = vld [vmem:[%s311 + $0x1] sm:$0xff]
      %v361 = vld [vmem:[%s311 + $0x11] sm:$0xff]
      %v362 = vld [vmem:[%s311 + $0x21] sm:$0xff]
      %v363 = vld [vmem:[%s311 + $0x31] sm:$0xff]
      %v364 = vld [vmem:[%s311 + $0x41] sm:$0xff]
      %v365 = vld [vmem:[%s311 + $0x51] sm:$0xff]
      %v366 = vld [vmem:[%s311 + $0x61] sm:$0xff]
      %v367 = vld [vmem:[%s311 + $0x71] sm:$0xff]
      %376 = vrot.lane.b32.xlu0 %v360, 4
      %v377 = vpop.permute.xlu0 %376
      %378 = vrot.lane.b32.xlu0 %v361, 4
      %v379 = vpop.permute.xlu0 %378
      %380 = vrot.lane.b32.xlu0 %v362, 4
      %v381 = vpop.permute.xlu0 %380
      %382 = vrot.lane.b32.xlu0 %v363, 4
      %v383 = vpop.permute.xlu0 %382
      %384 = vrot.lane.b32.xlu0 %v364, 4
      %v385 = vpop.permute.xlu0 %384
      %386 = vrot.lane.b32.xlu0 %v365, 4
      %v387 = vpop.permute.xlu0 %386
      %388 = vrot.lane.b32.xlu0 %v366, 4
      %v389 = vpop.permute.xlu0 %388
      %390 = vrot.lane.b32.xlu0 %v367, 4
      %v391 = vpop.permute.xlu0 %390
      %vm400 = vcmask 64544
      %401 = vst.msk [vmem:[#allocation2] sm:$0xff] %vm400, %v377
      %402 = vst.msk [vmem:[#allocation2 + $0x8] sm:$0xff] %vm400, %v379
      %403 = vst.msk [vmem:[#allocation2 + $0x10] sm:$0xff] %vm400, %v381
      %404 = vst.msk [vmem:[#allocation2 + $0x18] sm:$0xff] %vm400, %v383
      %405 = vst.msk [vmem:[#allocation2 + $0x20] sm:$0xff] %vm400, %v385
      %406 = vst.msk [vmem:[#allocation2 + $0x28] sm:$0xff] %vm400, %v387
      %407 = vst.msk [vmem:[#allocation2 + $0x30] sm:$0xff] %vm400, %v389
      %408 = vst.msk [vmem:[#allocation2 + $0x38] sm:$0xff] %vm400, %v391
      %v409 = vld [vmem:[%s311 + $0x2] sm:$0xff]
      %v410 = vld [vmem:[%s311 + $0x12] sm:$0xff]
      %v411 = vld [vmem:[%s311 + $0x22] sm:$0xff]
      %v412 = vld [vmem:[%s311 + $0x32] sm:$0xff]
      %v413 = vld [vmem:[%s311 + $0x42] sm:$0xff]
      %v414 = vld [vmem:[%s311 + $0x52] sm:$0xff]
      %v415 = vld [vmem:[%s311 + $0x62] sm:$0xff]
      %v416 = vld [vmem:[%s311 + $0x72] sm:$0xff]
      %425 = vrot.lane.b32.xlu0 %v409, 8
      %v426 = vpop.permute.xlu0 %425
      %427 = vrot.lane.b32.xlu0 %v410, 8
      %v428 = vpop.permute.xlu0 %427
      %429 = vrot.lane.b32.xlu0 %v411, 8
      %v430 = vpop.permute.xlu0 %429
      %431 = vrot.lane.b32.xlu0 %v412, 8
      %v432 = vpop.permute.xlu0 %431
      %433 = vrot.lane.b32.xlu0 %v413, 8
      %v434 = vpop.permute.xlu0 %433
      %435 = vrot.lane.b32.xlu0 %v414, 8
      %v436 = vpop.permute.xlu0 %435
      %437 = vrot.lane.b32.xlu0 %v415, 8
      %v438 = vpop.permute.xlu0 %437
      %439 = vrot.lane.b32.xlu0 %v416, 8
      %v440 = vpop.permute.xlu0 %439
      %vm449 = vcmask 97344
      %450 = vst.msk [vmem:[#allocation2] sm:$0xff] %vm449, %v426
      %451 = vst.msk [vmem:[#allocation2 + $0x8] sm:$0xff] %vm449, %v428
      %452 = vst.msk [vmem:[#allocation2 + $0x10] sm:$0xff] %vm449, %v430
      %453 = vst.msk [vmem:[#allocation2 + $0x18] sm:$0xff] %vm449, %v432
      %454 = vst.msk [vmem:[#allocation2 + $0x20] sm:$0xff] %vm449, %v434
      %455 = vst.msk [vmem:[#allocation2 + $0x28] sm:$0xff] %vm449, %v436
      %456 = vst.msk [vmem:[#allocation2 + $0x30] sm:$0xff] %vm449, %v438
      %457 = vst.msk [vmem:[#allocation2 + $0x38] sm:$0xff] %vm449, %v440
      %s458 = scalar_lea.vmem %s311, 16
      %v459 = vld [vmem:[%s458] sm:$0xff]
      %v460 = vld [vmem:[%s458 + $0x10] sm:$0xff]
      %v461 = vld [vmem:[%s458 + $0x20] sm:$0xff]
      %v462 = vld [vmem:[%s458 + $0x30] sm:$0xff]
      %v463 = vld [vmem:[%s458 + $0x40] sm:$0xff]
      %v464 = vld [vmem:[%s458 + $0x50] sm:$0xff]
      %v465 = vld [vmem:[%s458 + $0x60] sm:$0xff]
      %v466 = vld [vmem:[%s458 + $0x70] sm:$0xff]
      %475 = vrot.lane.b32.xlu0 %v459, 12
      %v476 = vpop.permute.xlu0 %475
      %477 = vrot.lane.b32.xlu0 %v460, 12
      %v478 = vpop.permute.xlu0 %477
      %479 = vrot.lane.b32.xlu0 %v461, 12
      %v480 = vpop.permute.xlu0 %479
      %481 = vrot.lane.b32.xlu0 %v462, 12
      %v482 = vpop.permute.xlu0 %481
      %483 = vrot.lane.b32.xlu0 %v463, 12
      %v484 = vpop.permute.xlu0 %483
      %485 = vrot.lane.b32.xlu0 %v464, 12
      %v486 = vpop.permute.xlu0 %485
      %487 = vrot.lane.b32.xlu0 %v465, 12
      %v488 = vpop.permute.xlu0 %487
      %489 = vrot.lane.b32.xlu0 %v466, 12
      %v490 = vpop.permute.xlu0 %489
      %vm499 = vcmask 130144
      %500 = vst.msk [vmem:[#allocation2] sm:$0xff] %vm499, %v476
      %501 = vst.msk [vmem:[#allocation2 + $0x8] sm:$0xff] %vm499, %v478
      %502 = vst.msk [vmem:[#allocation2 + $0x10] sm:$0xff] %vm499, %v480
      %503 = vst.msk [vmem:[#allocation2 + $0x18] sm:$0xff] %vm499, %v482
      %504 = vst.msk [vmem:[#allocation2 + $0x20] sm:$0xff] %vm499, %v484
      %505 = vst.msk [vmem:[#allocation2 + $0x28] sm:$0xff] %vm499, %v486
      %506 = vst.msk [vmem:[#allocation2 + $0x30] sm:$0xff] %vm499, %v488
      %507 = vst.msk [vmem:[#allocation2 + $0x38] sm:$0xff] %vm499, %v490
      %v508 = vld [vmem:[%s458 + $0x1] sm:$0xff]
      %v509 = vld [vmem:[%s458 + $0x11] sm:$0xff]
      %v510 = vld [vmem:[%s458 + $0x21] sm:$0xff]
      %v511 = vld [vmem:[%s458 + $0x31] sm:$0xff]
      %v512 = vld [vmem:[%s458 + $0x41] sm:$0xff]
      %v513 = vld [vmem:[%s458 + $0x51] sm:$0xff]
      %v514 = vld [vmem:[%s458 + $0x61] sm:$0xff]
      %v515 = vld [vmem:[%s458 + $0x71] sm:$0xff]
      %524 = vrot.lane.b32.xlu0 %v508, 16
      %v525 = vpop.permute.xlu0 %524
      %526 = vrot.lane.b32.xlu0 %v509, 16
      %v527 = vpop.permute.xlu0 %526
      %528 = vrot.lane.b32.xlu0 %v510, 16
      %v529 = vpop.permute.xlu0 %528
      %530 = vrot.lane.b32.xlu0 %v511, 16
      %v531 = vpop.permute.xlu0 %530
      %532 = vrot.lane.b32.xlu0 %v512, 16
      %v533 = vpop.permute.xlu0 %532
      %534 = vrot.lane.b32.xlu0 %v513, 16
      %v535 = vpop.permute.xlu0 %534
      %536 = vrot.lane.b32.xlu0 %v514, 16
      %v537 = vpop.permute.xlu0 %536
      %538 = vrot.lane.b32.xlu0 %v515, 16
      %v539 = vpop.permute.xlu0 %538
      %vm548 = vcmask 162944
      %549 = vst.msk [vmem:[#allocation2] sm:$0xff] %vm548, %v525
      %550 = vst.msk [vmem:[#allocation2 + $0x8] sm:$0xff] %vm548, %v527
      %551 = vst.msk [vmem:[#allocation2 + $0x10] sm:$0xff] %vm548, %v529
      %552 = vst.msk [vmem:[#allocation2 + $0x18] sm:$0xff] %vm548, %v531
      %553 = vst.msk [vmem:[#allocation2 + $0x20] sm:$0xff] %vm548, %v533
      %554 = vst.msk [vmem:[#allocation2 + $0x28] sm:$0xff] %vm548, %v535
      %555 = vst.msk [vmem:[#allocation2 + $0x30] sm:$0xff] %vm548, %v537
      %556 = vst.msk [vmem:[#allocation2 + $0x38] sm:$0xff] %vm548, %v539
      %v557 = vld [vmem:[%s458 + $0x2] sm:$0xff]
      %v558 = vld [vmem:[%s458 + $0x12] sm:$0xff]
      %v559 = vld [vmem:[%s458 + $0x22] sm:$0xff]
      %v560 = vld [vmem:[%s458 + $0x32] sm:$0xff]
      %v561 = vld [vmem:[%s458 + $0x42] sm:$0xff]
      %v562 = vld [vmem:[%s458 + $0x52] sm:$0xff]
      %v563 = vld [vmem:[%s458 + $0x62] sm:$0xff]
      %v564 = vld [vmem:[%s458 + $0x72] sm:$0xff]
      %573 = vrot.lane.b32.xlu0 %v557, 20
      %v574 = vpop.permute.xlu0 %573
      %575 = vrot.lane.b32.xlu0 %v558, 20
      %v576 = vpop.permute.xlu0 %575
      %577 = vrot.lane.b32.xlu0 %v559, 20
      %v578 = vpop.permute.xlu0 %577
      %579 = vrot.lane.b32.xlu0 %v560, 20
      %v580 = vpop.permute.xlu0 %579
      %581 = vrot.lane.b32.xlu0 %v561, 20
      %v582 = vpop.permute.xlu0 %581
      %583 = vrot.lane.b32.xlu0 %v562, 20
      %v584 = vpop.permute.xlu0 %583
      %585 = vrot.lane.b32.xlu0 %v563, 20
      %v586 = vpop.permute.xlu0 %585
      %587 = vrot.lane.b32.xlu0 %v564, 20
      %v588 = vpop.permute.xlu0 %587
      %vm597 = vcmask 195744
      %598 = vst.msk [vmem:[#allocation2] sm:$0xff] %vm597, %v574
      %599 = vst.msk [vmem:[#allocation2 + $0x8] sm:$0xff] %vm597, %v576
      %600 = vst.msk [vmem:[#allocation2 + $0x10] sm:$0xff] %vm597, %v578
      %601 = vst.msk [vmem:[#allocation2 + $0x18] sm:$0xff] %vm597, %v580
      %602 = vst.msk [vmem:[#allocation2 + $0x20] sm:$0xff] %vm597, %v582
      %603 = vst.msk [vmem:[#allocation2 + $0x28] sm:$0xff] %vm597, %v584
      %604 = vst.msk [vmem:[#allocation2 + $0x30] sm:$0xff] %vm597, %v586
      %605 = vst.msk [vmem:[#allocation2 + $0x38] sm:$0xff] %vm597, %v588
      %s606 = scalar_lea.vmem %s311, 32
      %v607 = vld [vmem:[%s606] sm:$0xff]
      %v608 = vld [vmem:[%s606 + $0x10] sm:$0xff]
      %v609 = vld [vmem:[%s606 + $0x20] sm:$0xff]
      %v610 = vld [vmem:[%s606 + $0x30] sm:$0xff]
      %v611 = vld [vmem:[%s606 + $0x40] sm:$0xff]
      %v612 = vld [vmem:[%s606 + $0x50] sm:$0xff]
      %v613 = vld [vmem:[%s606 + $0x60] sm:$0xff]
      %v614 = vld [vmem:[%s606 + $0x70] sm:$0xff]
      %623 = vrot.lane.b32.xlu0 %v607, 24
      %v624 = vpop.permute.xlu0 %623
      %625 = vrot.lane.b32.xlu0 %v608, 24
      %v626 = vpop.permute.xlu0 %625
      %627 = vrot.lane.b32.xlu0 %v609, 24
      %v628 = vpop.permute.xlu0 %627
      %629 = vrot.lane.b32.xlu0 %v610, 24
      %v630 = vpop.permute.xlu0 %629
      %631 = vrot.lane.b32.xlu0 %v611, 24
      %v632 = vpop.permute.xlu0 %631
      %633 = vrot.lane.b32.xlu0 %v612, 24
      %v634 = vpop.permute.xlu0 %633
      %635 = vrot.lane.b32.xlu0 %v613, 24
      %v636 = vpop.permute.xlu0 %635
      %637 = vrot.lane.b32.xlu0 %v614, 24
      %v638 = vpop.permute.xlu0 %637
      %vm647 = vcmask 228544
      %648 = vst.msk [vmem:[#allocation2] sm:$0xff] %vm647, %v624
      %649 = vst.msk [vmem:[#allocation2 + $0x8] sm:$0xff] %vm647, %v626
      %650 = vst.msk [vmem:[#allocation2 + $0x10] sm:$0xff] %vm647, %v628
      %651 = vst.msk [vmem:[#allocation2 + $0x18] sm:$0xff] %vm647, %v630
      %652 = vst.msk [vmem:[#allocation2 + $0x20] sm:$0xff] %vm647, %v632
      %653 = vst.msk [vmem:[#allocation2 + $0x28] sm:$0xff] %vm647, %v634
      %654 = vst.msk [vmem:[#allocation2 + $0x30] sm:$0xff] %vm647, %v636
      %655 = vst.msk [vmem:[#allocation2 + $0x38] sm:$0xff] %vm647, %v638
      %v656 = vld [vmem:[%s606 + $0x1] sm:$0xff]
      %v657 = vld [vmem:[%s606 + $0x11] sm:$0xff]
      %v658 = vld [vmem:[%s606 + $0x21] sm:$0xff]
      %v659 = vld [vmem:[%s606 + $0x31] sm:$0xff]
      %v660 = vld [vmem:[%s606 + $0x41] sm:$0xff]
      %v661 = vld [vmem:[%s606 + $0x51] sm:$0xff]
      %v662 = vld [vmem:[%s606 + $0x61] sm:$0xff]
      %v663 = vld [vmem:[%s606 + $0x71] sm:$0xff]
      %672 = vrot.lane.b32.xlu0 %v656, 28
      %v673 = vpop.permute.xlu0 %672
      %674 = vrot.lane.b32.xlu0 %v657, 28
      %v675 = vpop.permute.xlu0 %674
      %676 = vrot.lane.b32.xlu0 %v658, 28
      %v677 = vpop.permute.xlu0 %676
      %678 = vrot.lane.b32.xlu0 %v659, 28
      %v679 = vpop.permute.xlu0 %678
      %680 = vrot.lane.b32.xlu0 %v660, 28
      %v681 = vpop.permute.xlu0 %680
      %682 = vrot.lane.b32.xlu0 %v661, 28
      %v683 = vpop.permute.xlu0 %682
      %684 = vrot.lane.b32.xlu0 %v662, 28
      %v685 = vpop.permute.xlu0 %684
      %686 = vrot.lane.b32.xlu0 %v663, 28
      %v687 = vpop.permute.xlu0 %686
      %vm696 = vcmask 261344
      %697 = vst.msk [vmem:[#allocation2] sm:$0xff] %vm696, %v673
      %698 = vst.msk [vmem:[#allocation2 + $0x8] sm:$0xff] %vm696, %v675
      %699 = vst.msk [vmem:[#allocation2 + $0x10] sm:$0xff] %vm696, %v677
      %700 = vst.msk [vmem:[#allocation2 + $0x18] sm:$0xff] %vm696, %v679
      %701 = vst.msk [vmem:[#allocation2 + $0x20] sm:$0xff] %vm696, %v681
      %702 = vst.msk [vmem:[#allocation2 + $0x28] sm:$0xff] %vm696, %v683
      %703 = vst.msk [vmem:[#allocation2 + $0x30] sm:$0xff] %vm696, %v685
      %704 = vst.msk [vmem:[#allocation2 + $0x38] sm:$0xff] %vm696, %v687
      %v705 = vld [vmem:[%s606 + $0x2] sm:$0xff]
      %v706 = vld [vmem:[%s606 + $0x12] sm:$0xff]
      %v707 = vld [vmem:[%s606 + $0x22] sm:$0xff]
      %v708 = vld [vmem:[%s606 + $0x32] sm:$0xff]
      %v709 = vld [vmem:[%s606 + $0x42] sm:$0xff]
      %v710 = vld [vmem:[%s606 + $0x52] sm:$0xff]
      %v711 = vld [vmem:[%s606 + $0x62] sm:$0xff]
      %v712 = vld [vmem:[%s606 + $0x72] sm:$0xff]
      %721 = vrot.lane.b32.xlu0 %v705, 32
      %v722 = vpop.permute.xlu0 %721
      %723 = vrot.lane.b32.xlu0 %v706, 32
      %v724 = vpop.permute.xlu0 %723
      %725 = vrot.lane.b32.xlu0 %v707, 32
      %v726 = vpop.permute.xlu0 %725
      %727 = vrot.lane.b32.xlu0 %v708, 32
      %v728 = vpop.permute.xlu0 %727
      %729 = vrot.lane.b32.xlu0 %v709, 32
      %v730 = vpop.permute.xlu0 %729
      %731 = vrot.lane.b32.xlu0 %v710, 32
      %v732 = vpop.permute.xlu0 %731
      %733 = vrot.lane.b32.xlu0 %v711, 32
      %v734 = vpop.permute.xlu0 %733
      %735 = vrot.lane.b32.xlu0 %v712, 32
      %v736 = vpop.permute.xlu0 %735
      %vm745 = vcmask 294144
      %746 = vst.msk [vmem:[#allocation2] sm:$0xff] %vm745, %v722
      %747 = vst.msk [vmem:[#allocation2 + $0x8] sm:$0xff] %vm745, %v724
      %748 = vst.msk [vmem:[#allocation2 + $0x10] sm:$0xff] %vm745, %v726
      %749 = vst.msk [vmem:[#allocation2 + $0x18] sm:$0xff] %vm745, %v728
      %750 = vst.msk [vmem:[#allocation2 + $0x20] sm:$0xff] %vm745, %v730
      %751 = vst.msk [vmem:[#allocation2 + $0x28] sm:$0xff] %vm745, %v732
      %752 = vst.msk [vmem:[#allocation2 + $0x30] sm:$0xff] %vm745, %v734
      %753 = vst.msk [vmem:[#allocation2 + $0x38] sm:$0xff] %vm745, %v736
      %v754 = vld [vmem:[%s321] sm:$0xff]
      %v755 = vld [vmem:[%s321 + $0x10] sm:$0xff]
      %v756 = vld [vmem:[%s321 + $0x20] sm:$0xff]
      %v757 = vld [vmem:[%s321 + $0x30] sm:$0xff]
      %v758 = vld [vmem:[%s321 + $0x40] sm:$0xff]
      %v759 = vld [vmem:[%s321 + $0x50] sm:$0xff]
      %v760 = vld [vmem:[%s321 + $0x60] sm:$0xff]
      %v761 = vld [vmem:[%s321 + $0x70] sm:$0xff]
      %770 = vrot.lane.b32.xlu0 %v754, 36
      %v771 = vpop.permute.xlu0 %770
      %772 = vrot.lane.b32.xlu0 %v755, 36
      %v773 = vpop.permute.xlu0 %772
      %774 = vrot.lane.b32.xlu0 %v756, 36
      %v775 = vpop.permute.xlu0 %774
      %776 = vrot.lane.b32.xlu0 %v757, 36
      %v777 = vpop.permute.xlu0 %776
      %778 = vrot.lane.b32.xlu0 %v758, 36
      %v779 = vpop.permute.xlu0 %778
      %780 = vrot.lane.b32.xlu0 %v759, 36
      %v781 = vpop.permute.xlu0 %780
      %782 = vrot.lane.b32.xlu0 %v760, 36
      %v783 = vpop.permute.xlu0 %782
      %784 = vrot.lane.b32.xlu0 %v761, 36
      %v785 = vpop.permute.xlu0 %784
      %vm794 = vcmask 326944
      %795 = vst.msk [vmem:[#allocation2] sm:$0xff] %vm794, %v771
      %796 = vst.msk [vmem:[#allocation2 + $0x8] sm:$0xff] %vm794, %v773
      %797 = vst.msk [vmem:[#allocation2 + $0x10] sm:$0xff] %vm794, %v775
      %798 = vst.msk [vmem:[#allocation2 + $0x18] sm:$0xff] %vm794, %v777
      %799 = vst.msk [vmem:[#allocation2 + $0x20] sm:$0xff] %vm794, %v779
      %800 = vst.msk [vmem:[#allocation2 + $0x28] sm:$0xff] %vm794, %v781
      %801 = vst.msk [vmem:[#allocation2 + $0x30] sm:$0xff] %vm794, %v783
      %802 = vst.msk [vmem:[#allocation2 + $0x38] sm:$0xff] %vm794, %v785
      %v803 = vld [vmem:[%s321 + $0x1] sm:$0xff]
      %v804 = vld [vmem:[%s321 + $0x11] sm:$0xff]
      %v805 = vld [vmem:[%s321 + $0x21] sm:$0xff]
      %v806 = vld [vmem:[%s321 + $0x31] sm:$0xff]
      %v807 = vld [vmem:[%s321 + $0x41] sm:$0xff]
      %v808 = vld [vmem:[%s321 + $0x51] sm:$0xff]
      %v809 = vld [vmem:[%s321 + $0x61] sm:$0xff]
      %v810 = vld [vmem:[%s321 + $0x71] sm:$0xff]
      %819 = vrot.lane.b32.xlu0 %v803, 40
      %v820 = vpop.permute.xlu0 %819
      %821 = vrot.lane.b32.xlu0 %v804, 40
      %v822 = vpop.permute.xlu0 %821
      %823 = vrot.lane.b32.xlu0 %v805, 40
      %v824 = vpop.permute.xlu0 %823
      %825 = vrot.lane.b32.xlu0 %v806, 40
      %v826 = vpop.permute.xlu0 %825
      %827 = vrot.lane.b32.xlu0 %v807, 40
      %v828 = vpop.permute.xlu0 %827
      %829 = vrot.lane.b32.xlu0 %v808, 40
      %v830 = vpop.permute.xlu0 %829
      %831 = vrot.lane.b32.xlu0 %v809, 40
      %v832 = vpop.permute.xlu0 %831
      %833 = vrot.lane.b32.xlu0 %v810, 40
      %v834 = vpop.permute.xlu0 %833
      %vm843 = vcmask 359744
      %844 = vst.msk [vmem:[#allocation2] sm:$0xff] %vm843, %v820
      %845 = vst.msk [vmem:[#allocation2 + $0x8] sm:$0xff] %vm843, %v822
      %846 = vst.msk [vmem:[#allocation2 + $0x10] sm:$0xff] %vm843, %v824
      %847 = vst.msk [vmem:[#allocation2 + $0x18] sm:$0xff] %vm843, %v826
      %848 = vst.msk [vmem:[#allocation2 + $0x20] sm:$0xff] %vm843, %v828
      %849 = vst.msk [vmem:[#allocation2 + $0x28] sm:$0xff] %vm843, %v830
      %850 = vst.msk [vmem:[#allocation2 + $0x30] sm:$0xff] %vm843, %v832
      %851 = vst.msk [vmem:[#allocation2 + $0x38] sm:$0xff] %vm843, %v834
      %v852 = vld [vmem:[%s321 + $0x2] sm:$0xff]
      %v853 = vld [vmem:[%s321 + $0x12] sm:$0xff]
      %v854 = vld [vmem:[%s321 + $0x22] sm:$0xff]
      %v855 = vld [vmem:[%s321 + $0x32] sm:$0xff]
      %v856 = vld [vmem:[%s321 + $0x42] sm:$0xff]
      %v857 = vld [vmem:[%s321 + $0x52] sm:$0xff]
      %v858 = vld [vmem:[%s321 + $0x62] sm:$0xff]
      %v859 = vld [vmem:[%s321 + $0x72] sm:$0xff]
      %868 = vrot.lane.b32.xlu0 %v852, 44
      %v869 = vpop.permute.xlu0 %868
      %870 = vrot.lane.b32.xlu0 %v853, 44
      %v871 = vpop.permute.xlu0 %870
      %872 = vrot.lane.b32.xlu0 %v854, 44
      %v873 = vpop.permute.xlu0 %872
      %874 = vrot.lane.b32.xlu0 %v855, 44
      %v875 = vpop.permute.xlu0 %874
      %876 = vrot.lane.b32.xlu0 %v856, 44
      %v877 = vpop.permute.xlu0 %876
      %878 = vrot.lane.b32.xlu0 %v857, 44
      %v879 = vpop.permute.xlu0 %878
      %880 = vrot.lane.b32.xlu0 %v858, 44
      %v881 = vpop.permute.xlu0 %880
      %882 = vrot.lane.b32.xlu0 %v859, 44
      %v883 = vpop.permute.xlu0 %882
      %vm892 = vcmask 392544
      %893 = vst.msk [vmem:[#allocation2] sm:$0xff] %vm892, %v869
      %894 = vst.msk [vmem:[#allocation2 + $0x8] sm:$0xff] %vm892, %v871
      %895 = vst.msk [vmem:[#allocation2 + $0x10] sm:$0xff] %vm892, %v873
      %896 = vst.msk [vmem:[#allocation2 + $0x18] sm:$0xff] %vm892, %v875
      %897 = vst.msk [vmem:[#allocation2 + $0x20] sm:$0xff] %vm892, %v877
      %898 = vst.msk [vmem:[#allocation2 + $0x28] sm:$0xff] %vm892, %v879
      %899 = vst.msk [vmem:[#allocation2 + $0x30] sm:$0xff] %vm892, %v881
      %900 = vst.msk [vmem:[#allocation2 + $0x38] sm:$0xff] %vm892, %v883
      %s901 = scalar_lea.vmem %s321, 16
      %v902 = vld [vmem:[%s901] sm:$0xff]
      %v903 = vld [vmem:[%s901 + $0x10] sm:$0xff]
      %v904 = vld [vmem:[%s901 + $0x20] sm:$0xff]
      %v905 = vld [vmem:[%s901 + $0x30] sm:$0xff]
      %v906 = vld [vmem:[%s901 + $0x40] sm:$0xff]
      %v907 = vld [vmem:[%s901 + $0x50] sm:$0xff]
      %v908 = vld [vmem:[%s901 + $0x60] sm:$0xff]
      %v909 = vld [vmem:[%s901 + $0x70] sm:$0xff]
      %918 = vrot.lane.b32.xlu0 %v902, 48
      %v919 = vpop.permute.xlu0 %918
      %920 = vrot.lane.b32.xlu0 %v903, 48
      %v921 = vpop.permute.xlu0 %920
      %922 = vrot.lane.b32.xlu0 %v904, 48
      %v923 = vpop.permute.xlu0 %922
      %924 = vrot.lane.b32.xlu0 %v905, 48
      %v925 = vpop.permute.xlu0 %924
      %926 = vrot.lane.b32.xlu0 %v906, 48
      %v927 = vpop.permute.xlu0 %926
      %928 = vrot.lane.b32.xlu0 %v907, 48
      %v929 = vpop.permute.xlu0 %928
      %930 = vrot.lane.b32.xlu0 %v908, 48
      %v931 = vpop.permute.xlu0 %930
      %932 = vrot.lane.b32.xlu0 %v909, 48
      %v933 = vpop.permute.xlu0 %932
      %vm942 = vcmask 425344
      %943 = vst.msk [vmem:[#allocation2] sm:$0xff] %vm942, %v919
      %944 = vst.msk [vmem:[#allocation2 + $0x8] sm:$0xff] %vm942, %v921
      %945 = vst.msk [vmem:[#allocation2 + $0x10] sm:$0xff] %vm942, %v923
      %946 = vst.msk [vmem:[#allocation2 + $0x18] sm:$0xff] %vm942, %v925
      %947 = vst.msk [vmem:[#allocation2 + $0x20] sm:$0xff] %vm942, %v927
      %948 = vst.msk [vmem:[#allocation2 + $0x28] sm:$0xff] %vm942, %v929
      %949 = vst.msk [vmem:[#allocation2 + $0x30] sm:$0xff] %vm942, %v931
      %950 = vst.msk [vmem:[#allocation2 + $0x38] sm:$0xff] %vm942, %v933
      %v951 = vld [vmem:[%s901 + $0x1] sm:$0xff]
      %v952 = vld [vmem:[%s901 + $0x11] sm:$0xff]
      %v953 = vld [vmem:[%s901 + $0x21] sm:$0xff]
      %v954 = vld [vmem:[%s901 + $0x31] sm:$0xff]
      %v955 = vld [vmem:[%s901 + $0x41] sm:$0xff]
      %v956 = vld [vmem:[%s901 + $0x51] sm:$0xff]
      %v957 = vld [vmem:[%s901 + $0x61] sm:$0xff]
      %v958 = vld [vmem:[%s901 + $0x71] sm:$0xff]
      %967 = vrot.lane.b32.xlu0 %v951, 52
      %v968 = vpop.permute.xlu0 %967
      %969 = vrot.lane.b32.xlu0 %v952, 52
      %v970 = vpop.permute.xlu0 %969
      %971 = vrot.lane.b32.xlu0 %v953, 52
      %v972 = vpop.permute.xlu0 %971
      %973 = vrot.lane.b32.xlu0 %v954, 52
      %v974 = vpop.permute.xlu0 %973
      %975 = vrot.lane.b32.xlu0 %v955, 52
      %v976 = vpop.permute.xlu0 %975
      %977 = vrot.lane.b32.xlu0 %v956, 52
      %v978 = vpop.permute.xlu0 %977
      %979 = vrot.lane.b32.xlu0 %v957, 52
      %v980 = vpop.permute.xlu0 %979
      %981 = vrot.lane.b32.xlu0 %v958, 52
      %v982 = vpop.permute.xlu0 %981
      %vm991 = vcmask 458144
      %992 = vst.msk [vmem:[#allocation2] sm:$0xff] %vm991, %v968
      %993 = vst.msk [vmem:[#allocation2 + $0x8] sm:$0xff] %vm991, %v970
      %994 = vst.msk [vmem:[#allocation2 + $0x10] sm:$0xff] %vm991, %v972
      %995 = vst.msk [vmem:[#allocation2 + $0x18] sm:$0xff] %vm991, %v974
      %996 = vst.msk [vmem:[#allocation2 + $0x20] sm:$0xff] %vm991, %v976
      %997 = vst.msk [vmem:[#allocation2 + $0x28] sm:$0xff] %vm991, %v978
      %998 = vst.msk [vmem:[#allocation2 + $0x30] sm:$0xff] %vm991, %v980
      %999 = vst.msk [vmem:[#allocation2 + $0x38] sm:$0xff] %vm991, %v982
      %v1000 = vld [vmem:[%s901 + $0x2] sm:$0xff]
      %v1001 = vld [vmem:[%s901 + $0x12] sm:$0xff]
      %v1002 = vld [vmem:[%s901 + $0x22] sm:$0xff]
      %v1003 = vld [vmem:[%s901 + $0x32] sm:$0xff]
      %v1004 = vld [vmem:[%s901 + $0x42] sm:$0xff]
      %v1005 = vld [vmem:[%s901 + $0x52] sm:$0xff]
      %v1006 = vld [vmem:[%s901 + $0x62] sm:$0xff]
      %v1007 = vld [vmem:[%s901 + $0x72] sm:$0xff]
      %1016 = vrot.lane.b32.xlu0 %v1000, 56
      %v1017 = vpop.permute.xlu0 %1016
      %1018 = vrot.lane.b32.xlu0 %v1001, 56
      %v1019 = vpop.permute.xlu0 %1018
      %1020 = vrot.lane.b32.xlu0 %v1002, 56
      %v1021 = vpop.permute.xlu0 %1020
      %1022 = vrot.lane.b32.xlu0 %v1003, 56
      %v1023 = vpop.permute.xlu0 %1022
      %1024 = vrot.lane.b32.xlu0 %v1004, 56
      %v1025 = vpop.permute.xlu0 %1024
      %1026 = vrot.lane.b32.xlu0 %v1005, 56
      %v1027 = vpop.permute.xlu0 %1026
      %1028 = vrot.lane.b32.xlu0 %v1006, 56
      %v1029 = vpop.permute.xlu0 %1028
      %1030 = vrot.lane.b32.xlu0 %v1007, 56
      %v1031 = vpop.permute.xlu0 %1030
      %vm1040 = vcmask 490944
      %1041 = vst.msk [vmem:[#allocation2] sm:$0xff] %vm1040, %v1017
      %1042 = vst.msk [vmem:[#allocation2 + $0x8] sm:$0xff] %vm1040, %v1019
      %1043 = vst.msk [vmem:[#allocation2 + $0x10] sm:$0xff] %vm1040, %v1021
      %1044 = vst.msk [vmem:[#allocation2 + $0x18] sm:$0xff] %vm1040, %v1023
      %1045 = vst.msk [vmem:[#allocation2 + $0x20] sm:$0xff] %vm1040, %v1025
      %1046 = vst.msk [vmem:[#allocation2 + $0x28] sm:$0xff] %vm1040, %v1027
      %1047 = vst.msk [vmem:[#allocation2 + $0x30] sm:$0xff] %vm1040, %v1029
      %1048 = vst.msk [vmem:[#allocation2 + $0x38] sm:$0xff] %vm1040, %v1031
      %s1049 = scalar_lea.vmem %s321, 32
      %v1050 = vld [vmem:[%s1049] sm:$0xff]
      %v1051 = vld [vmem:[%s1049 + $0x10] sm:$0xff]
      %v1052 = vld [vmem:[%s1049 + $0x20] sm:$0xff]
      %v1053 = vld [vmem:[%s1049 + $0x30] sm:$0xff]
      %v1054 = vld [vmem:[%s1049 + $0x40] sm:$0xff]
      %v1055 = vld [vmem:[%s1049 + $0x50] sm:$0xff]
      %v1056 = vld [vmem:[%s1049 + $0x60] sm:$0xff]
      %v1057 = vld [vmem:[%s1049 + $0x70] sm:$0xff]
      %1066 = vrot.lane.b32.xlu0 %v1050, 60
      %v1067 = vpop.permute.xlu0 %1066
      %1068 = vrot.lane.b32.xlu0 %v1051, 60
      %v1069 = vpop.permute.xlu0 %1068
      %1070 = vrot.lane.b32.xlu0 %v1052, 60
      %v1071 = vpop.permute.xlu0 %1070
      %1072 = vrot.lane.b32.xlu0 %v1053, 60
      %v1073 = vpop.permute.xlu0 %1072
      %1074 = vrot.lane.b32.xlu0 %v1054, 60
      %v1075 = vpop.permute.xlu0 %1074
      %1076 = vrot.lane.b32.xlu0 %v1055, 60
      %v1077 = vpop.permute.xlu0 %1076
      %1078 = vrot.lane.b32.xlu0 %v1056, 60
      %v1079 = vpop.permute.xlu0 %1078
      %1080 = vrot.lane.b32.xlu0 %v1057, 60
      %v1081 = vpop.permute.xlu0 %1080
      %vm1090 = vcmask 523744
      %1091 = vst.msk [vmem:[#allocation2] sm:$0xff] %vm1090, %v1067
      %1092 = vst.msk [vmem:[#allocation2 + $0x8] sm:$0xff] %vm1090, %v1069
      %1093 = vst.msk [vmem:[#allocation2 + $0x10] sm:$0xff] %vm1090, %v1071
      %1094 = vst.msk [vmem:[#allocation2 + $0x18] sm:$0xff] %vm1090, %v1073
      %1095 = vst.msk [vmem:[#allocation2 + $0x20] sm:$0xff] %vm1090, %v1075
      %1096 = vst.msk [vmem:[#allocation2 + $0x28] sm:$0xff] %vm1090, %v1077
      %1097 = vst.msk [vmem:[#allocation2 + $0x30] sm:$0xff] %vm1090, %v1079
      %1098 = vst.msk [vmem:[#allocation2 + $0x38] sm:$0xff] %vm1090, %v1081
      %v1099 = vld [vmem:[%s1049 + $0x1] sm:$0xff]
      %v1100 = vld [vmem:[%s1049 + $0x11] sm:$0xff]
      %v1101 = vld [vmem:[%s1049 + $0x21] sm:$0xff]
      %v1102 = vld [vmem:[%s1049 + $0x31] sm:$0xff]
      %v1103 = vld [vmem:[%s1049 + $0x41] sm:$0xff]
      %v1104 = vld [vmem:[%s1049 + $0x51] sm:$0xff]
      %v1105 = vld [vmem:[%s1049 + $0x61] sm:$0xff]
      %v1106 = vld [vmem:[%s1049 + $0x71] sm:$0xff]
      %1115 = vrot.lane.b32.xlu0 %v1099, 64
      %v1116 = vpop.permute.xlu0 %1115
      %1117 = vrot.lane.b32.xlu0 %v1100, 64
      %v1118 = vpop.permute.xlu0 %1117
      %1119 = vrot.lane.b32.xlu0 %v1101, 64
      %v1120 = vpop.permute.xlu0 %1119
      %1121 = vrot.lane.b32.xlu0 %v1102, 64
      %v1122 = vpop.permute.xlu0 %1121
      %1123 = vrot.lane.b32.xlu0 %v1103, 64
      %v1124 = vpop.permute.xlu0 %1123
      %1125 = vrot.lane.b32.xlu0 %v1104, 64
      %v1126 = vpop.permute.xlu0 %1125
      %1127 = vrot.lane.b32.xlu0 %v1105, 64
      %v1128 = vpop.permute.xlu0 %1127
      %1129 = vrot.lane.b32.xlu0 %v1106, 64
      %v1130 = vpop.permute.xlu0 %1129
      %vm1139 = vcmask 556544
      %1140 = vst.msk [vmem:[#allocation2] sm:$0xff] %vm1139, %v1116
      %1141 = vst.msk [vmem:[#allocation2 + $0x8] sm:$0xff] %vm1139, %v1118
      %1142 = vst.msk [vmem:[#allocation2 + $0x10] sm:$0xff] %vm1139, %v1120
      %1143 = vst.msk [vmem:[#allocation2 + $0x18] sm:$0xff] %vm1139, %v1122
      %1144 = vst.msk [vmem:[#allocation2 + $0x20] sm:$0xff] %vm1139, %v1124
      %1145 = vst.msk [vmem:[#allocation2 + $0x28] sm:$0xff] %vm1139, %v1126
      %1146 = vst.msk [vmem:[#allocation2 + $0x30] sm:$0xff] %vm1139, %v1128
      %1147 = vst.msk [vmem:[#allocation2 + $0x38] sm:$0xff] %vm1139, %v1130
      %v1148 = vld [vmem:[%s1049 + $0x2] sm:$0xff]
      %v1149 = vld [vmem:[%s1049 + $0x12] sm:$0xff]
      %v1150 = vld [vmem:[%s1049 + $0x22] sm:$0xff]
      %v1151 = vld [vmem:[%s1049 + $0x32] sm:$0xff]
      %v1152 = vld [vmem:[%s1049 + $0x42] sm:$0xff]
      %v1153 = vld [vmem:[%s1049 + $0x52] sm:$0xff]
      %v1154 = vld [vmem:[%s1049 + $0x62] sm:$0xff]
      %v1155 = vld [vmem:[%s1049 + $0x72] sm:$0xff]
      %1164 = vrot.lane.b32.xlu0 %v1148, 68
      %v1165 = vpop.permute.xlu0 %1164
      %1166 = vrot.lane.b32.xlu0 %v1149, 68
      %v1167 = vpop.permute.xlu0 %1166
      %1168 = vrot.lane.b32.xlu0 %v1150, 68
      %v1169 = vpop.permute.xlu0 %1168
      %1170 = vrot.lane.b32.xlu0 %v1151, 68
      %v1171 = vpop.permute.xlu0 %1170
      %1172 = vrot.lane.b32.xlu0 %v1152, 68
      %v1173 = vpop.permute.xlu0 %1172
      %1174 = vrot.lane.b32.xlu0 %v1153, 68
      %v1175 = vpop.permute.xlu0 %1174
      %1176 = vrot.lane.b32.xlu0 %v1154, 68
      %v1177 = vpop.permute.xlu0 %1176
      %1178 = vrot.lane.b32.xlu0 %v1155, 68
      %v1179 = vpop.permute.xlu0 %1178
      %vm1188 = vcmask 589344
      %1189 = vst.msk [vmem:[#allocation2] sm:$0xff] %vm1188, %v1165
      %1190 = vst.msk [vmem:[#allocation2 + $0x8] sm:$0xff] %vm1188, %v1167
      %1191 = vst.msk [vmem:[#allocation2 + $0x10] sm:$0xff] %vm1188, %v1169
      %1192 = vst.msk [vmem:[#allocation2 + $0x18] sm:$0xff] %vm1188, %v1171
      %1193 = vst.msk [vmem:[#allocation2 + $0x20] sm:$0xff] %vm1188, %v1173
      %1194 = vst.msk [vmem:[#allocation2 + $0x28] sm:$0xff] %vm1188, %v1175
      %1195 = vst.msk [vmem:[#allocation2 + $0x30] sm:$0xff] %vm1188, %v1177
      %1196 = vst.msk [vmem:[#allocation2 + $0x38] sm:$0xff] %vm1188, %v1179
      %v1197 = vld [vmem:[%s332] sm:$0xff]
      %v1198 = vld [vmem:[%s332 + $0x10] sm:$0xff]
      %v1199 = vld [vmem:[%s332 + $0x20] sm:$0xff]
      %v1200 = vld [vmem:[%s332 + $0x30] sm:$0xff]
      %v1201 = vld [vmem:[%s332 + $0x40] sm:$0xff]
      %v1202 = vld [vmem:[%s332 + $0x50] sm:$0xff]
      %v1203 = vld [vmem:[%s332 + $0x60] sm:$0xff]
      %v1204 = vld [vmem:[%s332 + $0x70] sm:$0xff]
      %1213 = vrot.lane.b32.xlu0 %v1197, 72
      %v1214 = vpop.permute.xlu0 %1213
      %1215 = vrot.lane.b32.xlu0 %v1198, 72
      %v1216 = vpop.permute.xlu0 %1215
      %1217 = vrot.lane.b32.xlu0 %v1199, 72
      %v1218 = vpop.permute.xlu0 %1217
      %1219 = vrot.lane.b32.xlu0 %v1200, 72
      %v1220 = vpop.permute.xlu0 %1219
      %1221 = vrot.lane.b32.xlu0 %v1201, 72
      %v1222 = vpop.permute.xlu0 %1221
      %1223 = vrot.lane.b32.xlu0 %v1202, 72
      %v1224 = vpop.permute.xlu0 %1223
      %1225 = vrot.lane.b32.xlu0 %v1203, 72
      %v1226 = vpop.permute.xlu0 %1225
      %1227 = vrot.lane.b32.xlu0 %v1204, 72
      %v1228 = vpop.permute.xlu0 %1227
      %vm1237 = vcmask 622144
      %1238 = vst.msk [vmem:[#allocation2] sm:$0xff] %vm1237, %v1214
      %1239 = vst.msk [vmem:[#allocation2 + $0x8] sm:$0xff] %vm1237, %v1216
      %1240 = vst.msk [vmem:[#allocation2 + $0x10] sm:$0xff] %vm1237, %v1218
      %1241 = vst.msk [vmem:[#allocation2 + $0x18] sm:$0xff] %vm1237, %v1220
      %1242 = vst.msk [vmem:[#allocation2 + $0x20] sm:$0xff] %vm1237, %v1222
      %1243 = vst.msk [vmem:[#allocation2 + $0x28] sm:$0xff] %vm1237, %v1224
      %1244 = vst.msk [vmem:[#allocation2 + $0x30] sm:$0xff] %vm1237, %v1226
      %1245 = vst.msk [vmem:[#allocation2 + $0x38] sm:$0xff] %vm1237, %v1228
      %v1246 = vld [vmem:[%s332 + $0x1] sm:$0xff]
      %v1247 = vld [vmem:[%s332 + $0x11] sm:$0xff]
      %v1248 = vld [vmem:[%s332 + $0x21] sm:$0xff]
      %v1249 = vld [vmem:[%s332 + $0x31] sm:$0xff]
      %v1250 = vld [vmem:[%s332 + $0x41] sm:$0xff]
      %v1251 = vld [vmem:[%s332 + $0x51] sm:$0xff]
      %v1252 = vld [vmem:[%s332 + $0x61] sm:$0xff]
      %v1253 = vld [vmem:[%s332 + $0x71] sm:$0xff]
      %1262 = vrot.lane.b32.xlu0 %v1246, 76
      %v1263 = vpop.permute.xlu0 %1262
      %1264 = vrot.lane.b32.xlu0 %v1247, 76
      %v1265 = vpop.permute.xlu0 %1264
      %1266 = vrot.lane.b32.xlu0 %v1248, 76
      %v1267 = vpop.permute.xlu0 %1266
      %1268 = vrot.lane.b32.xlu0 %v1249, 76
      %v1269 = vpop.permute.xlu0 %1268
      %1270 = vrot.lane.b32.xlu0 %v1250, 76
      %v1271 = vpop.permute.xlu0 %1270
      %1272 = vrot.lane.b32.xlu0 %v1251, 76
      %v1273 = vpop.permute.xlu0 %1272
      %1274 = vrot.lane.b32.xlu0 %v1252, 76
      %v1275 = vpop.permute.xlu0 %1274
      %1276 = vrot.lane.b32.xlu0 %v1253, 76
      %v1277 = vpop.permute.xlu0 %1276
      %vm1286 = vcmask 654944
      %1287 = vst.msk [vmem:[#allocation2] sm:$0xff] %vm1286, %v1263
      %1288 = vst.msk [vmem:[#allocation2 + $0x8] sm:$0xff] %vm1286, %v1265
      %1289 = vst.msk [vmem:[#allocation2 + $0x10] sm:$0xff] %vm1286, %v1267
      %1290 = vst.msk [vmem:[#allocation2 + $0x18] sm:$0xff] %vm1286, %v1269
      %1291 = vst.msk [vmem:[#allocation2 + $0x20] sm:$0xff] %vm1286, %v1271
      %1292 = vst.msk [vmem:[#allocation2 + $0x28] sm:$0xff] %vm1286, %v1273
      %1293 = vst.msk [vmem:[#allocation2 + $0x30] sm:$0xff] %vm1286, %v1275
      %1294 = vst.msk [vmem:[#allocation2 + $0x38] sm:$0xff] %vm1286, %v1277
      %v1295 = vld [vmem:[%s332 + $0x2] sm:$0xff]
      %v1296 = vld [vmem:[%s332 + $0x12] sm:$0xff]
      %v1297 = vld [vmem:[%s332 + $0x22] sm:$0xff]
      %v1298 = vld [vmem:[%s332 + $0x32] sm:$0xff]
      %v1299 = vld [vmem:[%s332 + $0x42] sm:$0xff]
      %v1300 = vld [vmem:[%s332 + $0x52] sm:$0xff]
      %v1301 = vld [vmem:[%s332 + $0x62] sm:$0xff]
      %v1302 = vld [vmem:[%s332 + $0x72] sm:$0xff]
      %1311 = vrot.lane.b32.xlu0 %v1295, 80
      %v1312 = vpop.permute.xlu0 %1311
      %1313 = vrot.lane.b32.xlu0 %v1296, 80
      %v1314 = vpop.permute.xlu0 %1313
      %1315 = vrot.lane.b32.xlu0 %v1297, 80
      %v1316 = vpop.permute.xlu0 %1315
      %1317 = vrot.lane.b32.xlu0 %v1298, 80
      %v1318 = vpop.permute.xlu0 %1317
      %1319 = vrot.lane.b32.xlu0 %v1299, 80
      %v1320 = vpop.permute.xlu0 %1319
      %1321 = vrot.lane.b32.xlu0 %v1300, 80
      %v1322 = vpop.permute.xlu0 %1321
      %1323 = vrot.lane.b32.xlu0 %v1301, 80
      %v1324 = vpop.permute.xlu0 %1323
      %1325 = vrot.lane.b32.xlu0 %v1302, 80
      %v1326 = vpop.permute.xlu0 %1325
      %vm1335 = vcmask 687744
      %1336 = vst.msk [vmem:[#allocation2] sm:$0xff] %vm1335, %v1312
      %1337 = vst.msk [vmem:[#allocation2 + $0x8] sm:$0xff] %vm1335, %v1314
      %1338 = vst.msk [vmem:[#allocation2 + $0x10] sm:$0xff] %vm1335, %v1316
      %1339 = vst.msk [vmem:[#allocation2 + $0x18] sm:$0xff] %vm1335, %v1318
      %1340 = vst.msk [vmem:[#allocation2 + $0x20] sm:$0xff] %vm1335, %v1320
      %1341 = vst.msk [vmem:[#allocation2 + $0x28] sm:$0xff] %vm1335, %v1322
      %1342 = vst.msk [vmem:[#allocation2 + $0x30] sm:$0xff] %vm1335, %v1324
      %1343 = vst.msk [vmem:[#allocation2 + $0x38] sm:$0xff] %vm1335, %v1326
      %s1344 = scalar_lea.vmem %s332, 16
      %v1345 = vld [vmem:[%s1344] sm:$0xff]
      %v1346 = vld [vmem:[%s1344 + $0x10] sm:$0xff]
      %v1347 = vld [vmem:[%s1344 + $0x20] sm:$0xff]
      %v1348 = vld [vmem:[%s1344 + $0x30] sm:$0xff]
      %v1349 = vld [vmem:[%s1344 + $0x40] sm:$0xff]
      %v1350 = vld [vmem:[%s1344 + $0x50] sm:$0xff]
      %v1351 = vld [vmem:[%s1344 + $0x60] sm:$0xff]
      %v1352 = vld [vmem:[%s1344 + $0x70] sm:$0xff]
      %1361 = vrot.lane.b32.xlu0 %v1345, 84
      %v1362 = vpop.permute.xlu0 %1361
      %1363 = vrot.lane.b32.xlu0 %v1346, 84
      %v1364 = vpop.permute.xlu0 %1363
      %1365 = vrot.lane.b32.xlu0 %v1347, 84
      %v1366 = vpop.permute.xlu0 %1365
      %1367 = vrot.lane.b32.xlu0 %v1348, 84
      %v1368 = vpop.permute.xlu0 %1367
      %1369 = vrot.lane.b32.xlu0 %v1349, 84
      %v1370 = vpop.permute.xlu0 %1369
      %1371 = vrot.lane.b32.xlu0 %v1350, 84
      %v1372 = vpop.permute.xlu0 %1371
      %1373 = vrot.lane.b32.xlu0 %v1351, 84
      %v1374 = vpop.permute.xlu0 %1373
      %1375 = vrot.lane.b32.xlu0 %v1352, 84
      %v1376 = vpop.permute.xlu0 %1375
      %vm1385 = vcmask 720544
      %1386 = vst.msk [vmem:[#allocation2] sm:$0xff] %vm1385, %v1362
      %1387 = vst.msk [vmem:[#allocation2 + $0x8] sm:$0xff] %vm1385, %v1364
      %1388 = vst.msk [vmem:[#allocation2 + $0x10] sm:$0xff] %vm1385, %v1366
      %1389 = vst.msk [vmem:[#allocation2 + $0x18] sm:$0xff] %vm1385, %v1368
      %1390 = vst.msk [vmem:[#allocation2 + $0x20] sm:$0xff] %vm1385, %v1370
      %1391 = vst.msk [vmem:[#allocation2 + $0x28] sm:$0xff] %vm1385, %v1372
      %1392 = vst.msk [vmem:[#allocation2 + $0x30] sm:$0xff] %vm1385, %v1374
      %1393 = vst.msk [vmem:[#allocation2 + $0x38] sm:$0xff] %vm1385, %v1376
      %v1394 = vld [vmem:[%s1344 + $0x1] sm:$0xff]
      %v1395 = vld [vmem:[%s1344 + $0x11] sm:$0xff]
      %v1396 = vld [vmem:[%s1344 + $0x21] sm:$0xff]
      %v1397 = vld [vmem:[%s1344 + $0x31] sm:$0xff]
      %v1398 = vld [vmem:[%s1344 + $0x41] sm:$0xff]
      %v1399 = vld [vmem:[%s1344 + $0x51] sm:$0xff]
      %v1400 = vld [vmem:[%s1344 + $0x61] sm:$0xff]
      %v1401 = vld [vmem:[%s1344 + $0x71] sm:$0xff]
      %1410 = vrot.lane.b32.xlu0 %v1394, 88
      %v1411 = vpop.permute.xlu0 %1410
      %1412 = vrot.lane.b32.xlu0 %v1395, 88
      %v1413 = vpop.permute.xlu0 %1412
      %1414 = vrot.lane.b32.xlu0 %v1396, 88
      %v1415 = vpop.permute.xlu0 %1414
      %1416 = vrot.lane.b32.xlu0 %v1397, 88
      %v1417 = vpop.permute.xlu0 %1416
      %1418 = vrot.lane.b32.xlu0 %v1398, 88
      %v1419 = vpop.permute.xlu0 %1418
      %1420 = vrot.lane.b32.xlu0 %v1399, 88
      %v1421 = vpop.permute.xlu0 %1420
      %1422 = vrot.lane.b32.xlu0 %v1400, 88
      %v1423 = vpop.permute.xlu0 %1422
      %1424 = vrot.lane.b32.xlu0 %v1401, 88
      %v1425 = vpop.permute.xlu0 %1424
      %vm1434 = vcmask 753344
      %1435 = vst.msk [vmem:[#allocation2] sm:$0xff] %vm1434, %v1411
      %1436 = vst.msk [vmem:[#allocation2 + $0x8] sm:$0xff] %vm1434, %v1413
      %1437 = vst.msk [vmem:[#allocation2 + $0x10] sm:$0xff] %vm1434, %v1415
      %1438 = vst.msk [vmem:[#allocation2 + $0x18] sm:$0xff] %vm1434, %v1417
      %1439 = vst.msk [vmem:[#allocation2 + $0x20] sm:$0xff] %vm1434, %v1419
      %1440 = vst.msk [vmem:[#allocation2 + $0x28] sm:$0xff] %vm1434, %v1421
      %1441 = vst.msk [vmem:[#allocation2 + $0x30] sm:$0xff] %vm1434, %v1423
      %1442 = vst.msk [vmem:[#allocation2 + $0x38] sm:$0xff] %vm1434, %v1425
      %v1443 = vld [vmem:[%s1344 + $0x2] sm:$0xff]
      %v1444 = vld [vmem:[%s1344 + $0x12] sm:$0xff]
      %v1445 = vld [vmem:[%s1344 + $0x22] sm:$0xff]
      %v1446 = vld [vmem:[%s1344 + $0x32] sm:$0xff]
      %v1447 = vld [vmem:[%s1344 + $0x42] sm:$0xff]
      %v1448 = vld [vmem:[%s1344 + $0x52] sm:$0xff]
      %v1449 = vld [vmem:[%s1344 + $0x62] sm:$0xff]
      %v1450 = vld [vmem:[%s1344 + $0x72] sm:$0xff]
      %1459 = vrot.lane.b32.xlu0 %v1443, 92
      %v1460 = vpop.permute.xlu0 %1459
      %1461 = vrot.lane.b32.xlu0 %v1444, 92
      %v1462 = vpop.permute.xlu0 %1461
      %1463 = vrot.lane.b32.xlu0 %v1445, 92
      %v1464 = vpop.permute.xlu0 %1463
      %1465 = vrot.lane.b32.xlu0 %v1446, 92
      %v1466 = vpop.permute.xlu0 %1465
      %1467 = vrot.lane.b32.xlu0 %v1447, 92
      %v1468 = vpop.permute.xlu0 %1467
      %1469 = vrot.lane.b32.xlu0 %v1448, 92
      %v1470 = vpop.permute.xlu0 %1469
      %1471 = vrot.lane.b32.xlu0 %v1449, 92
      %v1472 = vpop.permute.xlu0 %1471
      %1473 = vrot.lane.b32.xlu0 %v1450, 92
      %v1474 = vpop.permute.xlu0 %1473
      %vm1483 = vcmask 786144
      %1484 = vst.msk [vmem:[#allocation2] sm:$0xff] %vm1483, %v1460
      %1485 = vst.msk [vmem:[#allocation2 + $0x8] sm:$0xff] %vm1483, %v1462
      %1486 = vst.msk [vmem:[#allocation2 + $0x10] sm:$0xff] %vm1483, %v1464
      %1487 = vst.msk [vmem:[#allocation2 + $0x18] sm:$0xff] %vm1483, %v1466
      %1488 = vst.msk [vmem:[#allocation2 + $0x20] sm:$0xff] %vm1483, %v1468
      %1489 = vst.msk [vmem:[#allocation2 + $0x28] sm:$0xff] %vm1483, %v1470
      %1490 = vst.msk [vmem:[#allocation2 + $0x30] sm:$0xff] %vm1483, %v1472
      %1491 = vst.msk [vmem:[#allocation2 + $0x38] sm:$0xff] %vm1483, %v1474
      %s1492 = scalar_lea.vmem %s332, 32
      %v1493 = vld [vmem:[%s1492] sm:$0xff]
      %v1494 = vld [vmem:[%s1492 + $0x10] sm:$0xff]
      %v1495 = vld [vmem:[%s1492 + $0x20] sm:$0xff]
      %v1496 = vld [vmem:[%s1492 + $0x30] sm:$0xff]
      %v1497 = vld [vmem:[%s1492 + $0x40] sm:$0xff]
      %v1498 = vld [vmem:[%s1492 + $0x50] sm:$0xff]
      %v1499 = vld [vmem:[%s1492 + $0x60] sm:$0xff]
      %v1500 = vld [vmem:[%s1492 + $0x70] sm:$0xff]
      %1509 = vrot.lane.b32.xlu0 %v1493, 96
      %v1510 = vpop.permute.xlu0 %1509
      %1511 = vrot.lane.b32.xlu0 %v1494, 96
      %v1512 = vpop.permute.xlu0 %1511
      %1513 = vrot.lane.b32.xlu0 %v1495, 96
      %v1514 = vpop.permute.xlu0 %1513
      %1515 = vrot.lane.b32.xlu0 %v1496, 96
      %v1516 = vpop.permute.xlu0 %1515
      %1517 = vrot.lane.b32.xlu0 %v1497, 96
      %v1518 = vpop.permute.xlu0 %1517
      %1519 = vrot.lane.b32.xlu0 %v1498, 96
      %v1520 = vpop.permute.xlu0 %1519
      %1521 = vrot.lane.b32.xlu0 %v1499, 96
      %v1522 = vpop.permute.xlu0 %1521
      %1523 = vrot.lane.b32.xlu0 %v1500, 96
      %v1524 = vpop.permute.xlu0 %1523
      %vm1533 = vcmask 818944
      %1534 = vst.msk [vmem:[#allocation2] sm:$0xff] %vm1533, %v1510
      %1535 = vst.msk [vmem:[#allocation2 + $0x8] sm:$0xff] %vm1533, %v1512
      %1536 = vst.msk [vmem:[#allocation2 + $0x10] sm:$0xff] %vm1533, %v1514
      %1537 = vst.msk [vmem:[#allocation2 + $0x18] sm:$0xff] %vm1533, %v1516
      %1538 = vst.msk [vmem:[#allocation2 + $0x20] sm:$0xff] %vm1533, %v1518
      %1539 = vst.msk [vmem:[#allocation2 + $0x28] sm:$0xff] %vm1533, %v1520
      %1540 = vst.msk [vmem:[#allocation2 + $0x30] sm:$0xff] %vm1533, %v1522
      %1541 = vst.msk [vmem:[#allocation2 + $0x38] sm:$0xff] %vm1533, %v1524
      %v1542 = vld [vmem:[%s1492 + $0x1] sm:$0xff]
      %v1543 = vld [vmem:[%s1492 + $0x11] sm:$0xff]
      %v1544 = vld [vmem:[%s1492 + $0x21] sm:$0xff]
      %v1545 = vld [vmem:[%s1492 + $0x31] sm:$0xff]
      %v1546 = vld [vmem:[%s1492 + $0x41] sm:$0xff]
      %v1547 = vld [vmem:[%s1492 + $0x51] sm:$0xff]
      %v1548 = vld [vmem:[%s1492 + $0x61] sm:$0xff]
      %v1549 = vld [vmem:[%s1492 + $0x71] sm:$0xff]
      %1558 = vrot.lane.b32.xlu0 %v1542, 100
      %v1559 = vpop.permute.xlu0 %1558
      %1560 = vrot.lane.b32.xlu0 %v1543, 100
      %v1561 = vpop.permute.xlu0 %1560
      %1562 = vrot.lane.b32.xlu0 %v1544, 100
      %v1563 = vpop.permute.xlu0 %1562
      %1564 = vrot.lane.b32.xlu0 %v1545, 100
      %v1565 = vpop.permute.xlu0 %1564
      %1566 = vrot.lane.b32.xlu0 %v1546, 100
      %v1567 = vpop.permute.xlu0 %1566
      %1568 = vrot.lane.b32.xlu0 %v1547, 100
      %v1569 = vpop.permute.xlu0 %1568
      %1570 = vrot.lane.b32.xlu0 %v1548, 100
      %v1571 = vpop.permute.xlu0 %1570
      %1572 = vrot.lane.b32.xlu0 %v1549, 100
      %v1573 = vpop.permute.xlu0 %1572
      %vm1582 = vcmask 851744
      %1583 = vst.msk [vmem:[#allocation2] sm:$0xff] %vm1582, %v1559
      %1584 = vst.msk [vmem:[#allocation2 + $0x8] sm:$0xff] %vm1582, %v1561
      %1585 = vst.msk [vmem:[#allocation2 + $0x10] sm:$0xff] %vm1582, %v1563
      %1586 = vst.msk [vmem:[#allocation2 + $0x18] sm:$0xff] %vm1582, %v1565
      %1587 = vst.msk [vmem:[#allocation2 + $0x20] sm:$0xff] %vm1582, %v1567
      %1588 = vst.msk [vmem:[#allocation2 + $0x28] sm:$0xff] %vm1582, %v1569
      %1589 = vst.msk [vmem:[#allocation2 + $0x30] sm:$0xff] %vm1582, %v1571
      %1590 = vst.msk [vmem:[#allocation2 + $0x38] sm:$0xff] %vm1582, %v1573
      %v1591 = vld [vmem:[%s1492 + $0x2] sm:$0xff]
      %v1592 = vld [vmem:[%s1492 + $0x12] sm:$0xff]
      %v1593 = vld [vmem:[%s1492 + $0x22] sm:$0xff]
      %v1594 = vld [vmem:[%s1492 + $0x32] sm:$0xff]
      %v1595 = vld [vmem:[%s1492 + $0x42] sm:$0xff]
      %v1596 = vld [vmem:[%s1492 + $0x52] sm:$0xff]
      %v1597 = vld [vmem:[%s1492 + $0x62] sm:$0xff]
      %v1598 = vld [vmem:[%s1492 + $0x72] sm:$0xff]
      %1607 = vrot.lane.b32.xlu0 %v1591, 104
      %v1608 = vpop.permute.xlu0 %1607
      %1609 = vrot.lane.b32.xlu0 %v1592, 104
      %v1610 = vpop.permute.xlu0 %1609
      %1611 = vrot.lane.b32.xlu0 %v1593, 104
      %v1612 = vpop.permute.xlu0 %1611
      %1613 = vrot.lane.b32.xlu0 %v1594, 104
      %v1614 = vpop.permute.xlu0 %1613
      %1615 = vrot.lane.b32.xlu0 %v1595, 104
      %v1616 = vpop.permute.xlu0 %1615
      %1617 = vrot.lane.b32.xlu0 %v1596, 104
      %v1618 = vpop.permute.xlu0 %1617
      %1619 = vrot.lane.b32.xlu0 %v1597, 104
      %v1620 = vpop.permute.xlu0 %1619
      %1621 = vrot.lane.b32.xlu0 %v1598, 104
      %v1622 = vpop.permute.xlu0 %1621
      %vm1631 = vcmask 884544
      %1632 = vst.msk [vmem:[#allocation2] sm:$0xff] %vm1631, %v1608
      %1633 = vst.msk [vmem:[#allocation2 + $0x8] sm:$0xff] %vm1631, %v1610
      %1634 = vst.msk [vmem:[#allocation2 + $0x10] sm:$0xff] %vm1631, %v1612
      %1635 = vst.msk [vmem:[#allocation2 + $0x18] sm:$0xff] %vm1631, %v1614
      %1636 = vst.msk [vmem:[#allocation2 + $0x20] sm:$0xff] %vm1631, %v1616
      %1637 = vst.msk [vmem:[#allocation2 + $0x28] sm:$0xff] %vm1631, %v1618
      %1638 = vst.msk [vmem:[#allocation2 + $0x30] sm:$0xff] %vm1631, %v1620
      %1639 = vst.msk [vmem:[#allocation2 + $0x38] sm:$0xff] %vm1631, %v1622
      %v1640 = vld [vmem:[#allocation2] sm:$0xff]
      %v1641 = vld [vmem:[#allocation2 + $0x8] sm:$0xff]
      %v1642 = vld [vmem:[#allocation2 + $0x10] sm:$0xff]
      %v1643 = vld [vmem:[#allocation2 + $0x18] sm:$0xff]
      %v1644 = vld [vmem:[#allocation2 + $0x20] sm:$0xff]
      %v1645 = vld [vmem:[#allocation2 + $0x28] sm:$0xff]
      %v1646 = vld [vmem:[#allocation2 + $0x30] sm:$0xff]
      %v1647 = vld [vmem:[#allocation2 + $0x38] sm:$0xff]
      %v1648 = vld [vmem:[%s3] sm:$0xff]
      %v1649 = vld [vmem:[%s3 + $0x8] sm:$0xff]
      %v1650 = vld [vmem:[%s3 + $0x10] sm:$0xff]
      %v1651 = vld [vmem:[%s3 + $0x18] sm:$0xff]
      %v1652 = vld [vmem:[%s3 + $0x20] sm:$0xff]
      %v1653 = vld [vmem:[%s3 + $0x28] sm:$0xff]
      %v1654 = vld [vmem:[%s3 + $0x30] sm:$0xff]
      %v1655 = vld [vmem:[%s3 + $0x38] sm:$0xff]
      %v1656 = vld [vmem:[%s3 + $0x40] sm:$0xff]
      %v1657 = vld [vmem:[%s3 + $0x48] sm:$0xff]
      %v1658 = vld [vmem:[%s3 + $0x50] sm:$0xff]
      %v1659 = vld [vmem:[%s3 + $0x58] sm:$0xff]
      %v1660 = vld [vmem:[%s3 + $0x60] sm:$0xff]
      %v1661 = vld [vmem:[%s3 + $0x68] sm:$0xf]
      %v1662 = vld [vmem:[%s4] sm:$0x1]
      %v1664 = vlaneseq
      %v1665 = vshrl.u32 %v1664, 7
      %v1666 = vsub.s32 0, %v1665
      %v1667 = vrot.slane %v1662, %v1666
      %vm1669 = vcmask 883712
      %v1671 = vsel %vm1669, %v1640, 0
      %v1674 = vsel %vm1669, %v1641, 0
      %v1677 = vsel %vm1669, %v1642, 0
      %v1680 = vsel %vm1669, %v1643, 0
      %v1683 = vsel %vm1669, %v1644, 0
      %v1686 = vsel %vm1669, %v1645, 0
      %v1689 = vsel %vm1669, %v1646, 0
      %v1692 = vsel %vm1669, %v1647, 0
      %vm1694 = vcmask 1043456
      %v1696 = vsel %vm1694, %v1661, 0
      %1698 = vmatprep.subr.mxu0 0.0
      %1699 = vmatpush1.msra.mxu0 %v1648
      %1700 = vmatprep.subr.mxu0 0.0
      %1701 = vmatpush1.msra.mxu0 %v1649
      %1702 = vmatprep.subr.mxu0 0.0
      %1703 = vmatpush1.msra.mxu0 %v1650
      %1704 = vmatprep.subr.mxu0 0.0
      %1705 = vmatpush1.msra.mxu0 %v1651
      %1706 = vmatprep.subr.mxu0 0.0
      %1707 = vmatpush1.msra.mxu0 %v1652
      %1708 = vmatprep.subr.mxu0 0.0
      %1709 = vmatpush1.msra.mxu0 %v1653
      %1710 = vmatprep.subr.mxu0 0.0
      %1711 = vmatpush1.msra.mxu0 %v1654
      %1712 = vmatprep.subr.mxu0 0.0
      %1713 = vmatpush1.msra.mxu0 %v1655
      %1714 = vmatprep.subr.mxu0 0.0
      %1715 = vmatpush1.msra.mxu0 %v1656
      %1716 = vmatprep.subr.mxu0 0.0
      %1717 = vmatpush1.msra.mxu0 %v1657
      %1718 = vmatprep.subr.mxu0 0.0
      %1719 = vmatpush1.msra.mxu0 %v1658
      %1720 = vmatprep.subr.mxu0 0.0
      %1721 = vmatpush1.msra.mxu0 %v1659
      %1722 = vmatprep.subr.mxu0 0.0
      %1723 = vmatpush1.msra.mxu0 %v1660
      %1724 = vmatprep.subr.mxu0 0.0
      %1725 = vmatpush1.msra.mxu0 %v1696
      %1726 = vmatprep.subr.mxu0 0.0
      %1727 = vmatpush1.msra.mxu0 0.0
      %1728 = vmatprep.subr.mxu0 0.0
      %1729 = vmatpush1.msra.mxu0 0.0
      %1730 = vmatprep.subr.mxu0 0.0
      %1731 = vmatpush1.msra.mxu0 0.0
      %1732 = vmatprep.subr.mxu0 0.0
      %1733 = vmatpush1.msra.mxu0 0.0
      %1734 = vmatprep.subr.mxu0 0.0
      %1735 = vmatpush1.msra.mxu0 0.0
      %1736 = vmatprep.subr.mxu0 0.0
      %1737 = vmatpush1.msra.mxu0 0.0
      %1738 = vmatprep.subr.mxu0 0.0
      %1739 = vmatpush1.msra.mxu0 0.0
      %1740 = vmatprep.subr.mxu0 0.0
      %1741 = vmatpush1.msra.mxu0 0.0
      %1742 = vmatprep.subr.mxu0 0.0
      %1743 = vmatpush1.msra.mxu0 0.0
      %1744 = vmatprep.subr.mxu0 0.0
      %1745 = vmatpush1.msra.mxu0 0.0
      %1746 = vmatprep.subr.mxu0 0.0
      %1747 = vmatpush1.msra.mxu0 0.0
      %1748 = vmatprep.subr.mxu0 0.0
      %1749 = vmatpush1.msra.mxu0 0.0
      %1750 = vmatprep.subr.mxu0 0.0
      %1751 = vmatpush1.msra.mxu0 0.0
      %1752 = vmatprep.subr.mxu0 0.0
      %1753 = vmatpush1.msra.mxu0 0.0
      %1754 = vmatprep.subr.mxu0 0.0
      %1755 = vmatpush1.msra.mxu0 0.0
      %1756 = vmatprep.subr.mxu0 0.0
      %1757 = vmatpush1.msra.mxu0 0.0
      %1758 = vmatprep.subr.mxu0 0.0
      %1759 = vmatpush1.msra.mxu0 0.0
      %1760 = vmatprep.subr.mxu0 0.0
      %1761 = vmatpush1.msra.mxu0 0.0
      %1762 = vmatprep.mubr.f32.mxu0 0.0
      %1763 = vmatmul.mubr.f32.gmra.mrb[0].mxu0 %v1671
      %v1764 = vpop.f32.mrb[0].mxu0
      %v1765 = vadd.f32 %v1667, %v1764
      %v1766 = vpop.f32.mrb[0].mxu0
      %1767 = vmatprep.mubr.f32.mxu0 0.0
      %1768 = vmatmul.mubr.f32.gmra.mrb[0].mxu0 %v1674
      %v1769 = vpop.f32.mrb[0].mxu0
      %v1770 = vadd.f32 %v1667, %v1769
      %v1771 = vpop.f32.mrb[0].mxu0
      %1772 = vmatprep.mubr.f32.mxu0 0.0
      %1773 = vmatmul.mubr.f32.gmra.mrb[0].mxu0 %v1677
      %v1774 = vpop.f32.mrb[0].mxu0
      %v1775 = vadd.f32 %v1667, %v1774
      %v1776 = vpop.f32.mrb[0].mxu0
      %1777 = vmatprep.mubr.f32.mxu0 0.0
      %1778 = vmatmul.mubr.f32.gmra.mrb[0].mxu0 %v1680
      %v1779 = vpop.f32.mrb[0].mxu0
      %v1780 = vadd.f32 %v1667, %v1779
      %v1781 = vpop.f32.mrb[0].mxu0
      %1782 = vmatprep.mubr.f32.mxu0 0.0
      %1783 = vmatmul.mubr.f32.gmra.mrb[0].mxu0 %v1683
      %v1784 = vpop.f32.mrb[0].mxu0
      %v1785 = vadd.f32 %v1667, %v1784
      %v1786 = vpop.f32.mrb[0].mxu0
      %1787 = vmatprep.mubr.f32.mxu0 0.0
      %1788 = vmatmul.mubr.f32.gmra.mrb[0].mxu0 %v1686
      %v1789 = vpop.f32.mrb[0].mxu0
      %v1790 = vadd.f32 %v1667, %v1789
      %v1791 = vpop.f32.mrb[0].mxu0
      %1792 = vmatprep.mubr.f32.mxu0 0.0
      %1793 = vmatmul.mubr.f32.gmra.mrb[0].mxu0 %v1689
      %v1794 = vpop.f32.mrb[0].mxu0
      %v1795 = vadd.f32 %v1667, %v1794
      %v1796 = vpop.f32.mrb[0].mxu0
      %1797 = vmatprep.mubr.f32.mxu0 0.0
      %1798 = vmatmul.mubr.f32.gmra.mrb[0].mxu0 %v1692
      %v1799 = vpop.f32.mrb[0].mxu0
      %v1800 = vadd.f32 %v1667, %v1799
      %v1801 = vpop.f32.mrb[0].mxu0
      %1802 = vdwg.mxu0
      %vm1803 = vcmask 261120
      %1804 = vst.msk [vmem:[%s342] sm:$0xff] %vm1803, %v1765
      %1805 = vst.msk [vmem:[%s342 + $0x8] sm:$0xff] %vm1803, %v1770
      %1806 = vst.msk [vmem:[%s342 + $0x10] sm:$0xff] %vm1803, %v1775
      %1807 = vst.msk [vmem:[%s342 + $0x18] sm:$0xff] %vm1803, %v1780
      %1808 = vst.msk [vmem:[%s342 + $0x20] sm:$0xff] %vm1803, %v1785
      %1809 = vst.msk [vmem:[%s342 + $0x28] sm:$0xff] %vm1803, %v1790
      %1810 = vst.msk [vmem:[%s342 + $0x30] sm:$0xff] %vm1803, %v1795
      %1811 = vst.msk [vmem:[%s342 + $0x38] sm:$0xff] %vm1803, %v1800
      %p1812 = scmp.lt.s32.totalorder %s20, 1
      %s1813 = scalar_select %p1812, %s20, 1
      %p1814 = scmp.lt.s32.totalorder %s21, 7
      %s1815 = scalar_select %p1814, %s21, 7
      %s1816 = smul.addr %s1815, 8
      %s1817 = smul.addr %s1813, 64
      %s1818 = sadd.s32 %s1816, %s1817
      %s1819 = smul.addr %s1818, 8
      %s1820 = scalar_lea.vmem %s5, %s1819
      // Predicated region
      $region41: #{tpu_custom_call.1} parent=39 // pred_check
        %p1821 = pneg %p178
      $region42: #{tpu_custom_call.1} parent=39 // pred_check_branch
        %1823 = sbr.rel (%p1821) target = $region44
      $region43: #{tpu_custom_call.1} parent=39 // pred_region
        _
      $region44: #{tpu_custom_call.1} parent=39 // pred_fallthru
        _
    $region40: #{tpu_custom_call.1} parent=5 // pred_fallthru
      _
    %p1824 = scmp.le.s32.totalorder 2, %s11
    // Predicated region
    $region45: #{tpu_custom_call.1} parent=5 // pred_check
      %p1825 = pneg %p1824
    $region46: #{tpu_custom_call.1} parent=5 // pred_check_branch
      %1827 = sbr.rel (%p1825) target = $region48
    $region47: #{tpu_custom_call.1} parent=5 // pred_region
      %s1828 = ssub.s32 %s11, 2
      // Predicated region
      $region49: #{tpu_custom_call.1} parent=47 // pred_check
        %p1829 = pneg %p184
      $region50: #{tpu_custom_call.1} parent=47 // pred_check_branch
        %1831 = sbr.rel (%p1829) target = $region52
      $region51: #{tpu_custom_call.1} parent=47 // pred_region
        %p1832 = scmp.lt.s32.totalorder %s22, 1
        %s1833 = scalar_select %p1832, %s22, 1
        %p1834 = scmp.lt.s32.totalorder %s23, 7
        %s1835 = scalar_select %p1834, %s23, 7
        %s1836 = smul.addr %s1835, 8
        %s1837 = smul.addr %s1833, 64
        %s1838 = sadd.s32 %s1836, %s1837
        %s1839 = smul.addr %s1838, 8
        %s1840 = scalar_lea.vmem %s5, %s1839
      $region52: #{tpu_custom_call.1} parent=47 // pred_fallthru
        _
    $region48: #{tpu_custom_call.1} parent=5 // pred_fallthru
      _
  $region6: #{tpu_custom_call.1} parent=0 // loop_footer
    %s15 = sadd.s32 1, %s11
  $region7: #{tpu_custom_call.1} parent=0 // loop_footer_branch
    %10 = sbr.rel target = $region3
  $region8: #{tpu_custom_call.1} parent=0 // loop_exit
    _

</llo_original>
